<compile_context>
chip_gen: v7x
topology: tpu7x:2x2x1
jax: 0.10.0
libtpu: 0.0.40
codegen_flags: <defaults>
</compile_context>

<pallas_src>
import functools

import jax
import jax.numpy as jnp
from jax.experimental import pallas as pl
from jax.experimental.pallas import tpu as pltpu


def _fls_kernel(num_layer, compute_dtype, x_ref, t_ref, rho_ref, *refs):
    """Fused MLP forward for one lane-tile of rows.

    refs = (w0, b0, w1, b1, ..., w_{L-1}, b_{L-1}, out_ref)
      wi : (out_i, in_i)   (PyTorch nn.Linear layout)
      bi : (out_i, 1)
      activations h : (features, tile_rows)  -- rows on lanes.
    """
    out_ref = refs[-1]
    param_refs = refs[:-1]

    x = x_ref[...]        # (1, T)
    t = t_ref[...]        # (1, T)
    rho = rho_ref[...]    # (1, T)

    # ---- layer 0: in_dim == 3, so do it as broadcast outer products on the
    # VPU instead of a degenerate K=3 matmul (also avoids any concat).
    w0 = param_refs[0][...]                       # (h0, 3)
    b0 = param_refs[1][...]                       # (h0, 1)
    h = (w0[:, 0:1] * x + w0[:, 1:2] * t + w0[:, 2:3] * rho) + b0   # (h0, T)
    if num_layer > 1:
        h = jnp.sin(h)

    # ---- hidden / output layers on the MXU: h = W @ h + b
    for layer in range(1, num_layer):
        w = param_refs[2 * layer][...].astype(compute_dtype)        # (o, i)
        b = param_refs[2 * layer + 1][...]                          # (o, 1)
        h = jnp.dot(w, h.astype(compute_dtype),
                    preferred_element_type=jnp.float32) + b
        if layer < num_layer - 1:
            h = jnp.tanh(h)

    out_ref[...] = h.astype(out_ref.dtype)


def fls_forward(x, t, rho, weights, biases, *,
                tile_rows=512, compute_dtype=jnp.float32):
    """FLS MLP forward.

    x, t, rho    : (N, 1) float arrays.
    weights[i]   : (out_i, in_i)  -- PyTorch nn.Linear layout.
    biases[i]    : (out_i, 1)
    Returns (N, out_dim) float32, matching the PyTorch module.
    """
    assert len(weights) == len(biases)
    num_layer = len(weights)
    assert weights[0].shape[1] == 3, "first layer expects cat(x, t, rho)"
    out_dim = weights[-1].shape[0]
    hidden_dim = weights[0].shape[0]

    n_rows = x.shape[0]
    n_pad = pl.cdiv(n_rows, tile_rows) * tile_rows

    def rows_to_lanes(a):
        a = jnp.reshape(a.astype(jnp.float32), (1, n_rows))
        if n_pad != n_rows:
            a = jnp.pad(a, ((0, 0), (0, n_pad - n_rows)))
        return a

    x_l = rows_to_lanes(x)
    t_l = rows_to_lanes(t)
    rho_l = rows_to_lanes(rho)

    grid = (n_pad // tile_rows,)

    data_spec = pl.BlockSpec((1, tile_rows), lambda i: (0, i))
    # Grid-invariant params: whole array resident in VMEM (no pipelining).
    param_spec = pl.BlockSpec(memory_space=pltpu.MemorySpace.VMEM)

    in_specs = [data_spec, data_spec, data_spec]
    param_args = []
    for w, b in zip(weights, biases):
        in_specs.append(param_spec)
        in_specs.append(param_spec)
        param_args.append(w)
        param_args.append(b)

    out_spec = pl.BlockSpec((out_dim, tile_rows), lambda i: (0, i))

    # Advisory cost model: matmul flops + sin/tanh transcendentals + HBM bytes.
    flops = int(2 * n_pad * sum(int(w.shape[0]) * int(w.shape[1]) for w in weights))
    transcendentals = int(n_pad * hidden_dim * max(num_layer - 1, 0))
    bytes_accessed = int(
        4 * n_pad * (3 + out_dim)
        + sum(int(w.size) * 4 + int(b.size) * 4 for w, b in zip(weights, biases)))

    kernel = functools.partial(_fls_kernel, num_layer, compute_dtype)

    out_t = pl.pallas_call(
        kernel,
        out_shape=jax.ShapeDtypeStruct((out_dim, n_pad), jnp.float32),
        grid_spec=pltpu.PrefetchScalarGridSpec(
            num_scalar_prefetch=0,
            grid=grid,
            in_specs=in_specs,
            out_specs=out_spec,
        ),
        compiler_params=pltpu.CompilerParams(
            dimension_semantics=("parallel",)),
        cost_estimate=pl.CostEstimate(
            flops=flops,
            transcendentals=transcendentals,
            bytes_accessed=bytes_accessed),
    )(x_l, t_l, rho_l, *param_args)

    # (out_dim, n_pad) -> (n_rows, out_dim); out_dim == 1 so this is cheap.
    return out_t[:, :n_rows].T


def init_fls_params(key, in_dim, hidden_dim, out_dim, num_layer):
    """PyTorch-style uniform(+/- 1/sqrt(fan_in)) init.

    weights[i] : (out_i, in_i)  (same layout as nn.Linear.weight)
    biases[i]  : (out_i, 1)
    """
    dims = [in_dim] + [hidden_dim] * (num_layer - 1) + [out_dim]
    weights, biases = [], []
    for i in range(num_layer):
        fan_in, fan_out = dims[i], dims[i + 1]
        key, kw, kb = jax.random.split(key, 3)
        bound = 1.0 / jnp.sqrt(fan_in)
        w = jax.random.uniform(kw, (fan_out, fan_in), jnp.float32, -bound, bound)
        b = jax.random.uniform(kb, (fan_out, 1), jnp.float32, -bound, bound)
        weights.append(w)
        biases.append(b)
    return weights, biases


def fls_reference(x, t, rho, weights, biases):
    """Pure-JAX reference mirroring the PyTorch forward (row-major layout)."""
    h = jnp.concatenate([x, t, rho], axis=-1)
    num_layer = len(weights)
    for i, (w, b) in enumerate(zip(weights, biases)):
        h = h @ w.T + b[:, 0]
        if i == 0 and num_layer > 1:
            h = jnp.sin(h)
        elif i < num_layer - 1:
            h = jnp.tanh(h)
    return h


if __name__ == "__main__":
    key = jax.random.PRNGKey(0)

    in_dim, hidden_dim, out_dim, num_layer = 3, 32, 1, 4
    batch = 1000  # deliberately not a multiple of tile_rows -> exercises padding

    key, kx, kt, kr, kp = jax.random.split(key, 5)
    x = jax.random.normal(kx, (batch, 1), jnp.float32)
    t = jax.random.normal(kt, (batch, 1), jnp.float32)
    rho = jax.random.normal(kr, (batch, 1), jnp.float32)

    weights, biases = init_fls_params(kp, in_dim, hidden_dim, out_dim, num_layer)

    out = fls_forward(x, t, rho, weights, biases, tile_rows=512)
    out = jax.block_until_ready(out)

    ref = fls_reference(x, t, rho, weights, biases)
    assert out.shape == (batch, out_dim)
    assert jnp.allclose(out, ref, atol=1e-5, rtol=1e-5), float(
        jnp.max(jnp.abs(out - ref)))

    print("KERNEL_OK")
</pallas_src>

<mosaic_0001>
module attributes {stable_mosaic.version = 11 : i64} {
  func.func @_fls_kernel(%arg0: i32, %arg1: memref<1x512xf32, #tpu.memory_space<vmem>>, %arg2: memref<1x512xf32, #tpu.memory_space<vmem>>, %arg3: memref<1x512xf32, #tpu.memory_space<vmem>>, %arg4: memref<32x3xf32, #tpu.memory_space<vmem>>, %arg5: memref<32x1xf32, #tpu.memory_space<vmem>>, %arg6: memref<32x32xf32, #tpu.memory_space<vmem>>, %arg7: memref<32x1xf32, #tpu.memory_space<vmem>>, %arg8: memref<32x32xf32, #tpu.memory_space<vmem>>, %arg9: memref<32x1xf32, #tpu.memory_space<vmem>>, %arg10: memref<1x32xf32, #tpu.memory_space<vmem>>, %arg11: memref<1x1xf32, #tpu.memory_space<vmem>>, %arg12: memref<1x512xf32, #tpu.memory_space<vmem>>) attributes {dimension_semantics = [#tpu.dimension_semantics<parallel>], iteration_bounds = array<i64: 2>, scalar_prefetch = 0 : i64, scratch_operands = 0 : i64, tpu.core_type = #tpu.core_type<tc>, window_params = [{transform_indices = @transform_0, window_bounds = array<i64: 1, 512>}, {transform_indices = @transform_1, window_bounds = array<i64: 1, 512>}, {transform_indices = @transform_2, window_bounds = array<i64: 1, 512>}, {pipeline_mode = #tpu.pipeline_mode<synchronous>, transform_indices = @transform_3, window_bounds = array<i64: 32, 3>}, {pipeline_mode = #tpu.pipeline_mode<synchronous>, transform_indices = @transform_4, window_bounds = array<i64: 32, 1>}, {pipeline_mode = #tpu.pipeline_mode<synchronous>, transform_indices = @transform_5, window_bounds = array<i64: 32, 32>}, {pipeline_mode = #tpu.pipeline_mode<synchronous>, transform_indices = @transform_6, window_bounds = array<i64: 32, 1>}, {pipeline_mode = #tpu.pipeline_mode<synchronous>, transform_indices = @transform_7, window_bounds = array<i64: 32, 32>}, {pipeline_mode = #tpu.pipeline_mode<synchronous>, transform_indices = @transform_8, window_bounds = array<i64: 32, 1>}, {pipeline_mode = #tpu.pipeline_mode<synchronous>, transform_indices = @transform_9, window_bounds = array<i64: 1, 32>}, {pipeline_mode = #tpu.pipeline_mode<synchronous>, transform_indices = @transform_10, window_bounds = array<i64: 1, 1>}, {transform_indices = @transform_11, window_bounds = array<i64: 1, 512>}]} {
    %c0 = arith.constant 0 : index
    %c0_0 = arith.constant 0 : index
    %0 = vector.load %arg1[%c0, %c0_0] : memref<1x512xf32, #tpu.memory_space<vmem>>, vector<1x512xf32>
    %c0_1 = arith.constant 0 : index
    %c0_2 = arith.constant 0 : index
    %1 = vector.load %arg2[%c0_1, %c0_2] : memref<1x512xf32, #tpu.memory_space<vmem>>, vector<1x512xf32>
    %c0_3 = arith.constant 0 : index
    %c0_4 = arith.constant 0 : index
    %2 = vector.load %arg3[%c0_3, %c0_4] : memref<1x512xf32, #tpu.memory_space<vmem>>, vector<1x512xf32>
    %c0_5 = arith.constant 0 : index
    %c0_6 = arith.constant 0 : index
    %3 = vector.load %arg4[%c0_5, %c0_6] : memref<32x3xf32, #tpu.memory_space<vmem>>, vector<32x3xf32>
    %c0_7 = arith.constant 0 : index
    %c0_8 = arith.constant 0 : index
    %4 = vector.load %arg5[%c0_7, %c0_8] : memref<32x1xf32, #tpu.memory_space<vmem>>, vector<32x1xf32>
    %5 = vector.extract_strided_slice %3 {offsets = [0, 0], sizes = [32, 1], strides = [1, 1]} : vector<32x3xf32> to vector<32x1xf32>
    %6 = vector.broadcast %5 : vector<32x1xf32> to vector<32x512xf32>
    %7 = vector.broadcast %0 : vector<1x512xf32> to vector<32x512xf32>
    %8 = arith.mulf %6, %7 : vector<32x512xf32>
    %9 = vector.extract_strided_slice %3 {offsets = [0, 1], sizes = [32, 1], strides = [1, 1]} : vector<32x3xf32> to vector<32x1xf32>
    %10 = vector.broadcast %9 : vector<32x1xf32> to vector<32x512xf32>
    %11 = vector.broadcast %1 : vector<1x512xf32> to vector<32x512xf32>
    %12 = arith.mulf %10, %11 : vector<32x512xf32>
    %13 = arith.addf %8, %12 : vector<32x512xf32>
    %14 = vector.extract_strided_slice %3 {offsets = [0, 2], sizes = [32, 1], strides = [1, 1]} : vector<32x3xf32> to vector<32x1xf32>
    %15 = vector.broadcast %14 : vector<32x1xf32> to vector<32x512xf32>
    %16 = vector.broadcast %2 : vector<1x512xf32> to vector<32x512xf32>
    %17 = arith.mulf %15, %16 : vector<32x512xf32>
    %18 = arith.addf %13, %17 : vector<32x512xf32>
    %19 = vector.broadcast %4 : vector<32x1xf32> to vector<32x512xf32>
    %20 = arith.addf %18, %19 : vector<32x512xf32>
    %21 = math.sin %20 : vector<32x512xf32>
    %c0_9 = arith.constant 0 : index
    %c0_10 = arith.constant 0 : index
    %22 = vector.load %arg6[%c0_9, %c0_10] : memref<32x32xf32, #tpu.memory_space<vmem>>, vector<32x32xf32>
    %c0_11 = arith.constant 0 : index
    %c0_12 = arith.constant 0 : index
    %23 = vector.load %arg7[%c0_11, %c0_12] : memref<32x1xf32, #tpu.memory_space<vmem>>, vector<32x1xf32>
    %cst = arith.constant dense<0.000000e+00> : vector<32x512xf32>
    %24 = tpu.matmul %22, %21, %cst {dimension_numbers = #tpu.dot_dimension_numbers<[1], [0], [0], [1], [0, 0, 1, 1], [], []>} : vector<32x32xf32>, vector<32x512xf32>, vector<32x512xf32> -> vector<32x512xf32>
    %25 = vector.broadcast %23 : vector<32x1xf32> to vector<32x512xf32>
    %26 = arith.addf %24, %25 : vector<32x512xf32>
    %27 = math.tanh %26 : vector<32x512xf32>
    %c0_13 = arith.constant 0 : index
    %c0_14 = arith.constant 0 : index
    %28 = vector.load %arg8[%c0_13, %c0_14] : memref<32x32xf32, #tpu.memory_space<vmem>>, vector<32x32xf32>
    %c0_15 = arith.constant 0 : index
    %c0_16 = arith.constant 0 : index
    %29 = vector.load %arg9[%c0_15, %c0_16] : memref<32x1xf32, #tpu.memory_space<vmem>>, vector<32x1xf32>
    %cst_17 = arith.constant dense<0.000000e+00> : vector<32x512xf32>
    %30 = tpu.matmul %28, %27, %cst_17 {dimension_numbers = #tpu.dot_dimension_numbers<[1], [0], [0], [1], [0, 0, 1, 1], [], []>} : vector<32x32xf32>, vector<32x512xf32>, vector<32x512xf32> -> vector<32x512xf32>
    %31 = vector.broadcast %29 : vector<32x1xf32> to vector<32x512xf32>
    %32 = arith.addf %30, %31 : vector<32x512xf32>
    %33 = math.tanh %32 : vector<32x512xf32>
    %c0_18 = arith.constant 0 : index
    %c0_19 = arith.constant 0 : index
    %34 = vector.load %arg10[%c0_18, %c0_19] : memref<1x32xf32, #tpu.memory_space<vmem>>, vector<1x32xf32>
    %c0_20 = arith.constant 0 : index
    %c0_21 = arith.constant 0 : index
    %35 = vector.load %arg11[%c0_20, %c0_21] : memref<1x1xf32, #tpu.memory_space<vmem>>, vector<1x1xf32>
    %cst_22 = arith.constant dense<0.000000e+00> : vector<1x512xf32>
    %36 = tpu.matmul %34, %33, %cst_22 {dimension_numbers = #tpu.dot_dimension_numbers<[1], [0], [0], [1], [0, 0, 1, 1], [], []>} : vector<1x32xf32>, vector<32x512xf32>, vector<1x512xf32> -> vector<1x512xf32>
    %37 = vector.broadcast %35 : vector<1x1xf32> to vector<1x512xf32>
    %38 = arith.addf %36, %37 : vector<1x512xf32>
    %c0_23 = arith.constant 0 : index
    %c0_24 = arith.constant 0 : index
    %39 = vector.load %arg12[%c0_23, %c0_24] : memref<1x512xf32, #tpu.memory_space<vmem>>, vector<1x512xf32>
    tpu.vector_store %arg12[%c0_23, %c0_24], %38 {strides = array<i32>} : memref<1x512xf32, #tpu.memory_space<vmem>>, vector<1x512xf32>,
    return
  }
  func.func @transform_0(%arg0: i32) -> (i32, i32) {
    %c0_i32 = arith.constant 0 : i32
    %c0_i32_0 = arith.constant 0 : i32
    return %c0_i32, %arg0 : i32, i32
  }
  func.func @transform_1(%arg0: i32) -> (i32, i32) {
    %c0_i32 = arith.constant 0 : i32
    %c0_i32_0 = arith.constant 0 : i32
    return %c0_i32, %arg0 : i32, i32
  }
  func.func @transform_2(%arg0: i32) -> (i32, i32) {
    %c0_i32 = arith.constant 0 : i32
    %c0_i32_0 = arith.constant 0 : i32
    return %c0_i32, %arg0 : i32, i32
  }
  func.func @transform_3(%arg0: i32) -> (i32, i32) {
    %c0_i32 = arith.constant 0 : i32
    %c0_i32_0 = arith.constant 0 : i32
    %c0_i32_1 = arith.constant 0 : i32
    return %c0_i32, %c0_i32_0 : i32, i32
  }
  func.func @transform_4(%arg0: i32) -> (i32, i32) {
    %c0_i32 = arith.constant 0 : i32
    %c0_i32_0 = arith.constant 0 : i32
    %c0_i32_1 = arith.constant 0 : i32
    return %c0_i32, %c0_i32_0 : i32, i32
  }
  func.func @transform_5(%arg0: i32) -> (i32, i32) {
    %c0_i32 = arith.constant 0 : i32
    %c0_i32_0 = arith.constant 0 : i32
    %c0_i32_1 = arith.constant 0 : i32
    return %c0_i32, %c0_i32_0 : i32, i32
  }
  func.func @transform_6(%arg0: i32) -> (i32, i32) {
    %c0_i32 = arith.constant 0 : i32
    %c0_i32_0 = arith.constant 0 : i32
    %c0_i32_1 = arith.constant 0 : i32
    return %c0_i32, %c0_i32_0 : i32, i32
  }
  func.func @transform_7(%arg0: i32) -> (i32, i32) {
    %c0_i32 = arith.constant 0 : i32
    %c0_i32_0 = arith.constant 0 : i32
    %c0_i32_1 = arith.constant 0 : i32
    return %c0_i32, %c0_i32_0 : i32, i32
  }
  func.func @transform_8(%arg0: i32) -> (i32, i32) {
    %c0_i32 = arith.constant 0 : i32
    %c0_i32_0 = arith.constant 0 : i32
    %c0_i32_1 = arith.constant 0 : i32
    return %c0_i32, %c0_i32_0 : i32, i32
  }
  func.func @transform_9(%arg0: i32) -> (i32, i32) {
    %c0_i32 = arith.constant 0 : i32
    %c0_i32_0 = arith.constant 0 : i32
    %c0_i32_1 = arith.constant 0 : i32
    return %c0_i32, %c0_i32_0 : i32, i32
  }
  func.func @transform_10(%arg0: i32) -> (i32, i32) {
    %c0_i32 = arith.constant 0 : i32
    %c0_i32_0 = arith.constant 0 : i32
    %c0_i32_1 = arith.constant 0 : i32
    return %c0_i32, %c0_i32_0 : i32, i32
  }
  func.func @transform_11(%arg0: i32) -> (i32, i32) {
    %c0_i32 = arith.constant 0 : i32
    %c0_i32_0 = arith.constant 0 : i32
    return %c0_i32, %arg0 : i32, i32
  }
}

</mosaic_0001>

<llo_original>
// kernel: tpu_custom_call.1
$region0: #{tpu_custom_call.1}
  #allocation0 [shape = 'u32[]', space=smem, size = 0x4, offset = 0x4, fixed_abs, tag = 'smem constant byte address 0x4 - core index']
  #allocation1 [shape = 'u32[144,128]{1,0:T(1,128)}', space=vmem, size = 0x12000, scoped, tag = 'internal scratch']
  #allocation2 [shape = 'f32[1,1]{1,0:T(1,128)S(1)}', space=vmem, size = 0x200, scoped, tag = 'scoped memory for tpu_custom_call.1']
  %s0 = inlined_call_operand.vmem [shape: f32[1,1024], index: 0, kind: input, shape index: {}]
  %s1 = inlined_call_operand.vmem [shape: f32[1,1024], index: 1, kind: input, shape index: {}]
  %s2 = inlined_call_operand.vmem [shape: f32[1,1024], index: 2, kind: input, shape index: {}]
  %s3 = inlined_call_operand.vmem [shape: f32[32,3], index: 3, kind: input, shape index: {}]
  %s4 = inlined_call_operand.vmem [shape: f32[32,1], index: 4, kind: input, shape index: {}]
  %s5 = inlined_call_operand.vmem [shape: f32[32,32], index: 5, kind: input, shape index: {}]
  %s6 = inlined_call_operand.vmem [shape: f32[32,1], index: 6, kind: input, shape index: {}]
  %s7 = inlined_call_operand.vmem [shape: f32[32,32], index: 7, kind: input, shape index: {}]
  %s8 = inlined_call_operand.vmem [shape: f32[32,1], index: 8, kind: input, shape index: {}]
  %s9 = inlined_call_operand.vmem [shape: f32[1,32], index: 9, kind: input, shape index: {}]
  %s10 = inlined_call_operand.<no memory space> [shape: f32[1,1], index: 10, kind: input, shape index: {}]
  %s11 = inlined_call_operand.hbm [shape: f32[1,1024], index: 11, kind: output, shape index: {}]
  %s12 = sld [smem:[#allocation0]]
  $region77: #{tpu_custom_call.1} parent=0
    _
  %s14 = ssub.s32 1, %s12
  %s15 = scalar_select 0, %s14, %s12
  %v16 = vstv %s10
  %17 = vst [vmem:[#allocation2] sm:$0x1] %v16
  $region1: #{tpu_custom_call.1} parent=0
    #allocation3 [shape = 'u8[4096]{0}', space=vmem, size = 0x1000, scoped, tag = 'output window, operand 0']
    #allocation4 [shape = 's32[2]{0}', space=sflag, size = 0x8, scoped, tag = 'scoped memory for tpu_custom_call.1']
    %18 = vsyncpa [#allocation4], 0
    %s19 = scalar_lea.sflag [#allocation4], 1
    %20 = vsyncpa %s19, 0
    loop: start=0, step=1, limit=4
    $region2: #{tpu_custom_call.1} parent=1 // loop_pre_header
      _
    $region3: #{tpu_custom_call.1} parent=1 // loop_header
      %s22 = sphi 0, %s26
      %p23 = scmp.ge.s32.totalorder %s22, 4
      %s32 = sphi 0, %s34
      %s35 = sphi 0, %s32
      %s36 = sphi 0, %s35
      %s52 = sphi 0, %s36
      %s58 = sphi 0, %s60
      %s61 = sphi 0, %s58
      %s62 = sphi 0, %s61
      %s78 = sphi 0, %s62
      %s84 = sphi 0, %s86
      %s87 = sphi 0, %s84
      %s88 = sphi 0, %s87
      %s104 = sphi 0, %s88
      %s108 = sphi 0, %s108
      %s110 = sphi 0, %s108
      %s111 = sphi 0, %s110
      %s125 = sphi 0, %s111
      %s129 = sphi 0, %s129
      %s131 = sphi 0, %s129
      %s132 = sphi 0, %s131
      %s146 = sphi 0, %s132
      %s150 = sphi 0, %s150
      %s152 = sphi 0, %s150
      %s153 = sphi 0, %s152
      %s167 = sphi 0, %s153
      %s171 = sphi 0, %s171
      %s173 = sphi 0, %s171
      %s174 = sphi 0, %s173
      %s188 = sphi 0, %s174
      %s192 = sphi 0, %s192
      %s194 = sphi 0, %s192
      %s195 = sphi 0, %s194
      %s209 = sphi 0, %s195
      %s213 = sphi 0, %s213
      %s215 = sphi 0, %s213
      %s216 = sphi 0, %s215
      %s230 = sphi 0, %s216
      %s234 = sphi 0, %s234
      %s236 = sphi 0, %s234
      %s237 = sphi 0, %s236
      %s251 = sphi 0, %s237
      %s255 = sphi 0, %s255
      %s257 = sphi 0, %s255
      %s258 = sphi 0, %s257
      %s272 = sphi 0, %s258
      %s278 = sphi 0, %s280
      %s281 = sphi 0, %s278
      %s282 = sphi 0, %s281
      %s298 = sphi 0, %s282
    $region4: #{tpu_custom_call.1} parent=1 // loop_header_branch
      %25 = sbr.rel (%p23) target = $region8
    $region5: #{tpu_custom_call.1} parent=1 // loop_body
      %s27 = ssub.s32 %s22, 1
      %s28 = ssub.s32 %s22, 2
      %s29 = sadd.s32 %s22, 1
      %s30 = ssub.s32 %s22, %s29
      %p31 = scmp.eq.s32.totalorder %s30, 0
      %s33 = sadd.s32 %s32, 1
      %s34 = scalar_select %p31, %s32, %s33
      %p37 = pneg %p31
      %p38 = scmp.eq.s32.totalorder %s22, 1
      %p39 = por %p37, %p38
      %p40 = scmp.ne.s32.totalorder %s32, %s35
      %p41 = scmp.eq.s32.totalorder %s22, 0
      %p42 = por %p40, %p41
      %p43 = scmp.ne.s32.totalorder %s32, %s35
      %p44 = scmp.eq.s32.totalorder %s27, 1
      %p45 = por %p43, %p44
      %p46 = scmp.ne.s32.totalorder %s35, %s36
      %p47 = scmp.eq.s32.totalorder %s27, 0
      %p48 = por %p46, %p47
      %p49 = scmp.ne.s32.totalorder %s35, %s36
      %p50 = scmp.eq.s32.totalorder %s28, 1
      %p51 = por %p49, %p50
      %p53 = scmp.ne.s32.totalorder %s36, %s52
      %p54 = scmp.eq.s32.totalorder %s28, 0
      %p55 = por %p53, %p54
      %s56 = ssub.s32 %s22, %s29
      %p57 = scmp.eq.s32.totalorder %s56, 0
      %s59 = sadd.s32 %s58, 1
      %s60 = scalar_select %p57, %s58, %s59
      %p63 = pneg %p57
      %p64 = scmp.eq.s32.totalorder %s22, 1
      %p65 = por %p63, %p64
      %p66 = scmp.ne.s32.totalorder %s58, %s61
      %p67 = scmp.eq.s32.totalorder %s22, 0
      %p68 = por %p66, %p67
      %p69 = scmp.ne.s32.totalorder %s58, %s61
      %p70 = scmp.eq.s32.totalorder %s27, 1
      %p71 = por %p69, %p70
      %p72 = scmp.ne.s32.totalorder %s61, %s62
      %p73 = scmp.eq.s32.totalorder %s27, 0
      %p74 = por %p72, %p73
      %p75 = scmp.ne.s32.totalorder %s61, %s62
      %p76 = scmp.eq.s32.totalorder %s28, 1
      %p77 = por %p75, %p76
      %p79 = scmp.ne.s32.totalorder %s62, %s78
      %p80 = scmp.eq.s32.totalorder %s28, 0
      %p81 = por %p79, %p80
      %s82 = ssub.s32 %s22, %s29
      %p83 = scmp.eq.s32.totalorder %s82, 0
      %s85 = sadd.s32 %s84, 1
      %s86 = scalar_select %p83, %s84, %s85
      %p89 = pneg %p83
      %p90 = scmp.eq.s32.totalorder %s22, 1
      %p91 = por %p89, %p90
      %p92 = scmp.ne.s32.totalorder %s84, %s87
      %p93 = scmp.eq.s32.totalorder %s22, 0
      %p94 = por %p92, %p93
      %p95 = scmp.ne.s32.totalorder %s84, %s87
      %p96 = scmp.eq.s32.totalorder %s27, 1
      %p97 = por %p95, %p96
      %p98 = scmp.ne.s32.totalorder %s87, %s88
      %p99 = scmp.eq.s32.totalorder %s27, 0
      %p100 = por %p98, %p99
      %p101 = scmp.ne.s32.totalorder %s87, %s88
      %p102 = scmp.eq.s32.totalorder %s28, 1
      %p103 = por %p101, %p102
      %p105 = scmp.ne.s32.totalorder %s88, %s104
      %p106 = scmp.eq.s32.totalorder %s28, 0
      %p107 = por %p105, %p106
      %s109 = sadd.s32 %s108, 1
      %p112 = scmp.eq.s32.totalorder %s22, 1
      %p113 = scmp.ne.s32.totalorder %s108, %s110
      %p114 = scmp.eq.s32.totalorder %s22, 0
      %p115 = por %p113, %p114
      %p116 = scmp.ne.s32.totalorder %s108, %s110
      %p117 = scmp.eq.s32.totalorder %s27, 1
      %p118 = por %p116, %p117
      %p119 = scmp.ne.s32.totalorder %s110, %s111
      %p120 = scmp.eq.s32.totalorder %s27, 0
      %p121 = por %p119, %p120
      %p122 = scmp.ne.s32.totalorder %s110, %s111
      %p123 = scmp.eq.s32.totalorder %s28, 1
      %p124 = por %p122, %p123
      %p126 = scmp.ne.s32.totalorder %s111, %s125
      %p127 = scmp.eq.s32.totalorder %s28, 0
      %p128 = por %p126, %p127
      %s130 = sadd.s32 %s129, 1
      %p133 = scmp.eq.s32.totalorder %s22, 1
      %p134 = scmp.ne.s32.totalorder %s129, %s131
      %p135 = scmp.eq.s32.totalorder %s22, 0
      %p136 = por %p134, %p135
      %p137 = scmp.ne.s32.totalorder %s129, %s131
      %p138 = scmp.eq.s32.totalorder %s27, 1
      %p139 = por %p137, %p138
      %p140 = scmp.ne.s32.totalorder %s131, %s132
      %p141 = scmp.eq.s32.totalorder %s27, 0
      %p142 = por %p140, %p141
      %p143 = scmp.ne.s32.totalorder %s131, %s132
      %p144 = scmp.eq.s32.totalorder %s28, 1
      %p145 = por %p143, %p144
      %p147 = scmp.ne.s32.totalorder %s132, %s146
      %p148 = scmp.eq.s32.totalorder %s28, 0
      %p149 = por %p147, %p148
      %s151 = sadd.s32 %s150, 1
      %p154 = scmp.eq.s32.totalorder %s22, 1
      %p155 = scmp.ne.s32.totalorder %s150, %s152
      %p156 = scmp.eq.s32.totalorder %s22, 0
      %p157 = por %p155, %p156
      %p158 = scmp.ne.s32.totalorder %s150, %s152
      %p159 = scmp.eq.s32.totalorder %s27, 1
      %p160 = por %p158, %p159
      %p161 = scmp.ne.s32.totalorder %s152, %s153
      %p162 = scmp.eq.s32.totalorder %s27, 0
      %p163 = por %p161, %p162
      %p164 = scmp.ne.s32.totalorder %s152, %s153
      %p165 = scmp.eq.s32.totalorder %s28, 1
      %p166 = por %p164, %p165
      %p168 = scmp.ne.s32.totalorder %s153, %s167
      %p169 = scmp.eq.s32.totalorder %s28, 0
      %p170 = por %p168, %p169
      %s172 = sadd.s32 %s171, 1
      %p175 = scmp.eq.s32.totalorder %s22, 1
      %p176 = scmp.ne.s32.totalorder %s171, %s173
      %p177 = scmp.eq.s32.totalorder %s22, 0
      %p178 = por %p176, %p177
      %p179 = scmp.ne.s32.totalorder %s171, %s173
      %p180 = scmp.eq.s32.totalorder %s27, 1
      %p181 = por %p179, %p180
      %p182 = scmp.ne.s32.totalorder %s173, %s174
      %p183 = scmp.eq.s32.totalorder %s27, 0
      %p184 = por %p182, %p183
      %p185 = scmp.ne.s32.totalorder %s173, %s174
      %p186 = scmp.eq.s32.totalorder %s28, 1
      %p187 = por %p185, %p186
      %p189 = scmp.ne.s32.totalorder %s174, %s188
      %p190 = scmp.eq.s32.totalorder %s28, 0
      %p191 = por %p189, %p190
      %s193 = sadd.s32 %s192, 1
      %p196 = scmp.eq.s32.totalorder %s22, 1
      %p197 = scmp.ne.s32.totalorder %s192, %s194
      %p198 = scmp.eq.s32.totalorder %s22, 0
      %p199 = por %p197, %p198
      %p200 = scmp.ne.s32.totalorder %s192, %s194
      %p201 = scmp.eq.s32.totalorder %s27, 1
      %p202 = por %p200, %p201
      %p203 = scmp.ne.s32.totalorder %s194, %s195
      %p204 = scmp.eq.s32.totalorder %s27, 0
      %p205 = por %p203, %p204
      %p206 = scmp.ne.s32.totalorder %s194, %s195
      %p207 = scmp.eq.s32.totalorder %s28, 1
      %p208 = por %p206, %p207
      %p210 = scmp.ne.s32.totalorder %s195, %s209
      %p211 = scmp.eq.s32.totalorder %s28, 0
      %p212 = por %p210, %p211
      %s214 = sadd.s32 %s213, 1
      %p217 = scmp.eq.s32.totalorder %s22, 1
      %p218 = scmp.ne.s32.totalorder %s213, %s215
      %p219 = scmp.eq.s32.totalorder %s22, 0
      %p220 = por %p218, %p219
      %p221 = scmp.ne.s32.totalorder %s213, %s215
      %p222 = scmp.eq.s32.totalorder %s27, 1
      %p223 = por %p221, %p222
      %p224 = scmp.ne.s32.totalorder %s215, %s216
      %p225 = scmp.eq.s32.totalorder %s27, 0
      %p226 = por %p224, %p225
      %p227 = scmp.ne.s32.totalorder %s215, %s216
      %p228 = scmp.eq.s32.totalorder %s28, 1
      %p229 = por %p227, %p228
      %p231 = scmp.ne.s32.totalorder %s216, %s230
      %p232 = scmp.eq.s32.totalorder %s28, 0
      %p233 = por %p231, %p232
      %s235 = sadd.s32 %s234, 1
      %p238 = scmp.eq.s32.totalorder %s22, 1
      %p239 = scmp.ne.s32.totalorder %s234, %s236
      %p240 = scmp.eq.s32.totalorder %s22, 0
      %p241 = por %p239, %p240
      %p242 = scmp.ne.s32.totalorder %s234, %s236
      %p243 = scmp.eq.s32.totalorder %s27, 1
      %p244 = por %p242, %p243
      %p245 = scmp.ne.s32.totalorder %s236, %s237
      %p246 = scmp.eq.s32.totalorder %s27, 0
      %p247 = por %p245, %p246
      %p248 = scmp.ne.s32.totalorder %s236, %s237
      %p249 = scmp.eq.s32.totalorder %s28, 1
      %p250 = por %p248, %p249
      %p252 = scmp.ne.s32.totalorder %s237, %s251
      %p253 = scmp.eq.s32.totalorder %s28, 0
      %p254 = por %p252, %p253
      %s256 = sadd.s32 %s255, 1
      %p259 = scmp.eq.s32.totalorder %s22, 1
      %p260 = scmp.ne.s32.totalorder %s255, %s257
      %p261 = scmp.eq.s32.totalorder %s22, 0
      %p262 = por %p260, %p261
      %p263 = scmp.ne.s32.totalorder %s255, %s257
      %p264 = scmp.eq.s32.totalorder %s27, 1
      %p265 = por %p263, %p264
      %p266 = scmp.ne.s32.totalorder %s257, %s258
      %p267 = scmp.eq.s32.totalorder %s27, 0
      %p268 = por %p266, %p267
      %p269 = scmp.ne.s32.totalorder %s257, %s258
      %p270 = scmp.eq.s32.totalorder %s28, 1
      %p271 = por %p269, %p270
      %p273 = scmp.ne.s32.totalorder %s258, %s272
      %p274 = scmp.eq.s32.totalorder %s28, 0
      %p275 = por %p273, %p274
      %s276 = ssub.s32 %s22, %s29
      %p277 = scmp.eq.s32.totalorder %s276, 0
      %s279 = sadd.s32 %s278, 1
      %s280 = scalar_select %p277, %s278, %s279
      %p283 = pneg %p277
      %p284 = scmp.eq.s32.totalorder %s22, 1
      %p285 = por %p283, %p284
      %p286 = scmp.ne.s32.totalorder %s278, %s281
      %p287 = scmp.eq.s32.totalorder %s22, 0
      %p288 = por %p286, %p287
      %p289 = scmp.ne.s32.totalorder %s278, %s281
      %p290 = scmp.eq.s32.totalorder %s27, 1
      %p291 = por %p289, %p290
      %p292 = scmp.ne.s32.totalorder %s281, %s282
      %p293 = scmp.eq.s32.totalorder %s27, 0
      %p294 = por %p292, %p293
      %p295 = scmp.ne.s32.totalorder %s281, %s282
      %p296 = scmp.eq.s32.totalorder %s28, 1
      %p297 = por %p295, %p296
      %p299 = scmp.ne.s32.totalorder %s282, %s298
      %p300 = scmp.eq.s32.totalorder %s28, 0
      %p301 = por %p299, %p300
      %p302 = scmp.le.s32.totalorder 1, %s22
      %p303 = scmp.lt.s32.totalorder %s22, 3
      %p304 = pnand %p302, %p303
      %p305 = pneg %p304
      // Predicated region
      $region9: #{tpu_custom_call.1} parent=5 // pred_check
        _
      $region10: #{tpu_custom_call.1} parent=5 // pred_check_branch
        %307 = sbr.rel (%p304) target = $region12
      $region11: #{tpu_custom_call.1} parent=5 // pred_region
        %s308 = ssub.s32 %s22, 1
        // Predicated region
        $region13: #{tpu_custom_call.1} parent=11 // pred_check
          %p309 = pneg %p121
        $region14: #{tpu_custom_call.1} parent=11 // pred_check_branch
          %311 = sbr.rel (%p309) target = $region16
        $region15: #{tpu_custom_call.1} parent=11 // pred_region
          _
        $region16: #{tpu_custom_call.1} parent=11 // pred_fallthru
          _
        // Predicated region
        $region17: #{tpu_custom_call.1} parent=11 // pred_check
          %p312 = pneg %p142
        $region18: #{tpu_custom_call.1} parent=11 // pred_check_branch
          %314 = sbr.rel (%p312) target = $region20
        $region19: #{tpu_custom_call.1} parent=11 // pred_region
          _
        $region20: #{tpu_custom_call.1} parent=11 // pred_fallthru
          _
        // Predicated region
        $region21: #{tpu_custom_call.1} parent=11 // pred_check
          %p315 = pneg %p163
        $region22: #{tpu_custom_call.1} parent=11 // pred_check_branch
          %317 = sbr.rel (%p315) target = $region24
        $region23: #{tpu_custom_call.1} parent=11 // pred_region
          _
        $region24: #{tpu_custom_call.1} parent=11 // pred_fallthru
          _
        // Predicated region
        $region25: #{tpu_custom_call.1} parent=11 // pred_check
          %p318 = pneg %p184
        $region26: #{tpu_custom_call.1} parent=11 // pred_check_branch
          %320 = sbr.rel (%p318) target = $region28
        $region27: #{tpu_custom_call.1} parent=11 // pred_region
          _
        $region28: #{tpu_custom_call.1} parent=11 // pred_fallthru
          _
        // Predicated region
        $region29: #{tpu_custom_call.1} parent=11 // pred_check
          %p321 = pneg %p205
        $region30: #{tpu_custom_call.1} parent=11 // pred_check_branch
          %323 = sbr.rel (%p321) target = $region32
        $region31: #{tpu_custom_call.1} parent=11 // pred_region
          _
        $region32: #{tpu_custom_call.1} parent=11 // pred_fallthru
          _
        // Predicated region
        $region33: #{tpu_custom_call.1} parent=11 // pred_check
          %p324 = pneg %p226
        $region34: #{tpu_custom_call.1} parent=11 // pred_check_branch
          %326 = sbr.rel (%p324) target = $region36
        $region35: #{tpu_custom_call.1} parent=11 // pred_region
          _
        $region36: #{tpu_custom_call.1} parent=11 // pred_fallthru
          _
        // Predicated region
        $region37: #{tpu_custom_call.1} parent=11 // pred_check
          %p327 = pneg %p247
        $region38: #{tpu_custom_call.1} parent=11 // pred_check_branch
          %329 = sbr.rel (%p327) target = $region40
        $region39: #{tpu_custom_call.1} parent=11 // pred_region
          _
        $region40: #{tpu_custom_call.1} parent=11 // pred_fallthru
          _
        // Predicated region
        $region41: #{tpu_custom_call.1} parent=11 // pred_check
          %p330 = pneg %p268
        $region42: #{tpu_custom_call.1} parent=11 // pred_check_branch
          %332 = sbr.rel (%p330) target = $region44
        $region43: #{tpu_custom_call.1} parent=11 // pred_region
          _
        $region44: #{tpu_custom_call.1} parent=11 // pred_fallthru
          _
      $region12: #{tpu_custom_call.1} parent=5 // pred_fallthru
        _
      %p333 = scmp.lt.s32.totalorder %s22, 2
      // Predicated region
      $region45: #{tpu_custom_call.1} parent=5 // pred_check
        %p334 = pneg %p333
      $region46: #{tpu_custom_call.1} parent=5 // pred_check_branch
        %336 = sbr.rel (%p334) target = $region48
      $region47: #{tpu_custom_call.1} parent=5 // pred_region
        // Predicated region
        $region49: #{tpu_custom_call.1} parent=47 // pred_check
          %p337 = pneg %p42
        $region50: #{tpu_custom_call.1} parent=47 // pred_check_branch
          %339 = sbr.rel (%p337) target = $region52
        $region51: #{tpu_custom_call.1} parent=47 // pred_region
          %s340 = smul.u32 4, %s22
          %p341 = scmp.lt.s32.totalorder %s340, 7
          %s342 = scalar_select %p341, %s340, 7
          %s343 = scalar_lea.vmem %s0, %s342
          %s344 = smul.u32 4, %s22
        $region52: #{tpu_custom_call.1} parent=47 // pred_fallthru
          _
        // Predicated region
        $region53: #{tpu_custom_call.1} parent=47 // pred_check
          %p345 = pneg %p68
        $region54: #{tpu_custom_call.1} parent=47 // pred_check_branch
          %347 = sbr.rel (%p345) target = $region56
        $region55: #{tpu_custom_call.1} parent=47 // pred_region
          %s348 = smul.u32 4, %s22
          %p349 = scmp.lt.s32.totalorder %s348, 7
          %s350 = scalar_select %p349, %s348, 7
          %s351 = scalar_lea.vmem %s1, %s350
          %s352 = smul.u32 4, %s22
        $region56: #{tpu_custom_call.1} parent=47 // pred_fallthru
          _
        // Predicated region
        $region57: #{tpu_custom_call.1} parent=47 // pred_check
          %p353 = pneg %p94
        $region58: #{tpu_custom_call.1} parent=47 // pred_check_branch
          %355 = sbr.rel (%p353) target = $region60
        $region59: #{tpu_custom_call.1} parent=47 // pred_region
          %s356 = smul.u32 4, %s22
          %p357 = scmp.lt.s32.totalorder %s356, 7
          %s358 = scalar_select %p357, %s356, 7
          %s359 = scalar_lea.vmem %s2, %s358
          %s360 = smul.u32 4, %s22
        $region60: #{tpu_custom_call.1} parent=47 // pred_fallthru
          _
      $region48: #{tpu_custom_call.1} parent=5 // pred_fallthru
        _
      %p361 = scmp.le.s32.totalorder 1, %s22
      %p362 = scmp.lt.s32.totalorder %s22, 3
      %p363 = pnand %p361, %p362
      %p364 = pneg %p363
      // Predicated region
      $region61: #{tpu_custom_call.1} parent=5 // pred_check
        _
      $region62: #{tpu_custom_call.1} parent=5 // pred_check_branch
        %366 = sbr.rel (%p363) target = $region64
      $region63: #{tpu_custom_call.1} parent=5 // pred_region
        %s367 = ssub.s32 %s22, 1
        %s368 = smul.u32 4, %s27
        %p369 = scmp.lt.s32.totalorder %s368, 7
        %s370 = scalar_select %p369, %s368, 7
        %s371 = scalar_lea.vmem %s0, %s370
        %p372 = pneg %p48
        %p373 = pneg %p45
        %s374 = smul.u32 4, %s27
        %p375 = scmp.lt.s32.totalorder %s374, 7
        %s376 = scalar_select %p375, %s374, 7
        %s377 = scalar_lea.vmem %s1, %s376
        %p378 = pneg %p74
        %p379 = pneg %p71
        %s380 = smul.u32 4, %s27
        %p381 = scmp.lt.s32.totalorder %s380, 7
        %s382 = scalar_select %p381, %s380, 7
        %s383 = scalar_lea.vmem %s2, %s382
        %p384 = pneg %p100
        %p385 = pneg %p97
        %p386 = pneg %p121
        %p387 = pneg %p118
        %p388 = pneg %p142
        %p389 = pneg %p139
        %p390 = pneg %p163
        %p391 = pneg %p160
        %p392 = pneg %p184
        %p393 = pneg %p181
        %p394 = pneg %p205
        %p395 = pneg %p202
        %p396 = pneg %p226
        %p397 = pneg %p223
        %p398 = pneg %p247
        %p399 = pneg %p244
        %p400 = pneg %p268
        %p401 = pneg %p265
        %p402 = pneg %p294
        %p403 = pneg %p291
        %s404 = sand.u32 %s281, 1
        %s405 = scalar_lea.sflag [#allocation4], %s404
        %s406 = sand.u32 %s281, 1
        %s407 = smul.addr %s406, 4
        %s408 = scalar_lea.vmem [#allocation3], %s407
        %s409 = smul.u32 4, %s27
        %p410 = scmp.lt.s32.totalorder %s409, 7
        %s411 = scalar_select %p410, %s409, 7
        %s412 = scalar_lea.vmem %s0, %s411
        %s413 = smul.u32 4, %s27
        %s414 = smul.u32 4, %s27
        %p415 = scmp.lt.s32.totalorder %s414, 7
        %s416 = scalar_select %p415, %s414, 7
        %s417 = scalar_lea.vmem %s1, %s416
        %s418 = smul.u32 4, %s27
        %s419 = smul.u32 4, %s27
        %p420 = scmp.lt.s32.totalorder %s419, 7
        %s421 = scalar_select %p420, %s419, 7
        %s422 = scalar_lea.vmem %s2, %s421
        %s423 = smul.u32 4, %s27
        %s424 = smul.u32 4, %s27
        %v425 = vld [vmem:[%s412] sm:$0xf]
        %v426 = vld [vmem:[%s417] sm:$0xf]
        %v427 = vld [vmem:[%s422] sm:$0xf]
        %v428 = vld [vmem:[%s3] sm:$0xff]
        %v429 = vld [vmem:[%s3 + $0x8] sm:$0xff]
        %v430 = vld [vmem:[%s3 + $0x10] sm:$0xff]
        %v431 = vld [vmem:[%s3 + $0x18] sm:$0xff]
        %v432 = vld [vmem:[%s4] sm:$0xff]
        %v433 = vld [vmem:[%s4 + $0x8] sm:$0xff]
        %v434 = vld [vmem:[%s4 + $0x10] sm:$0xff]
        %v435 = vld [vmem:[%s4 + $0x18] sm:$0xff]
        %437 = vset.pattern.permute.xlu0 0
        %438 = vperm.xlu0 %437, %v428
        %v439 = vpop.permute.xlu0 %438
        %442 = vset.pattern.permute.xlu0 0
        %443 = vperm.xlu0 %442, %v429
        %v444 = vpop.permute.xlu0 %443
        %447 = vset.pattern.permute.xlu0 0
        %448 = vperm.xlu0 %447, %v430
        %v449 = vpop.permute.xlu0 %448
        %452 = vset.pattern.permute.xlu0 0
        %453 = vperm.xlu0 %452, %v431
        %v454 = vpop.permute.xlu0 %453
        %v457 = vlaneseq
        %v458 = vshrl.u32 %v457, 7
        %v459 = vsub.s32 0, %v458
        %v460 = vrot.slane %v425, %v459
        %v461 = vlaneseq
        %v462 = vshrl.u32 %v461, 7
        %v463 = vsub.s32 1, %v462
        %v464 = vrot.slane %v425, %v463
        %v465 = vlaneseq
        %v466 = vshrl.u32 %v465, 7
        %v467 = vsub.s32 2, %v466
        %v468 = vrot.slane %v425, %v467
        %v469 = vlaneseq
        %v470 = vshrl.u32 %v469, 7
        %v471 = vsub.s32 3, %v470
        %v472 = vrot.slane %v425, %v471
        %v477 = vmul.f32 %v439, %v460
        %v478 = vmul.f32 %v439, %v464
        %v479 = vmul.f32 %v439, %v468
        %v480 = vmul.f32 %v439, %v472
        %v481 = vmul.f32 %v444, %v460
        %v482 = vmul.f32 %v444, %v464
        %v483 = vmul.f32 %v444, %v468
        %v484 = vmul.f32 %v444, %v472
        %v485 = vmul.f32 %v449, %v460
        %v486 = vmul.f32 %v449, %v464
        %v487 = vmul.f32 %v449, %v468
        %v488 = vmul.f32 %v449, %v472
        %v489 = vmul.f32 %v454, %v460
        %v490 = vmul.f32 %v454, %v464
        %v491 = vmul.f32 %v454, %v468
        %v492 = vmul.f32 %v454, %v472
        %493 = vset.pattern.permute.xlu0 1
        %494 = vperm.xlu0 %493, %v428
        %v495 = vpop.permute.xlu0 %494
        %497 = vset.pattern.permute.xlu0 1
        %498 = vperm.xlu0 %497, %v429
        %v499 = vpop.permute.xlu0 %498
        %501 = vset.pattern.permute.xlu0 1
        %502 = vperm.xlu0 %501, %v430
        %v503 = vpop.permute.xlu0 %502
        %505 = vset.pattern.permute.xlu0 1
        %506 = vperm.xlu0 %505, %v431
        %v507 = vpop.permute.xlu0 %506
        %v510 = vlaneseq
        %v511 = vshrl.u32 %v510, 7
        %v512 = vsub.s32 0, %v511
        %v513 = vrot.slane %v426, %v512
        %v514 = vlaneseq
        %v515 = vshrl.u32 %v514, 7
        %v516 = vsub.s32 1, %v515
        %v517 = vrot.slane %v426, %v516
        %v518 = vlaneseq
        %v519 = vshrl.u32 %v518, 7
        %v520 = vsub.s32 2, %v519
        %v521 = vrot.slane %v426, %v520
        %v522 = vlaneseq
        %v523 = vshrl.u32 %v522, 7
        %v524 = vsub.s32 3, %v523
        %v525 = vrot.slane %v426, %v524
        %v530 = vmul.f32 %v495, %v513
        %v531 = vmul.f32 %v495, %v517
        %v532 = vmul.f32 %v495, %v521
        %v533 = vmul.f32 %v495, %v525
        %v534 = vmul.f32 %v499, %v513
        %v535 = vmul.f32 %v499, %v517
        %v536 = vmul.f32 %v499, %v521
        %v537 = vmul.f32 %v499, %v525
        %v538 = vmul.f32 %v503, %v513
        %v539 = vmul.f32 %v503, %v517
        %v540 = vmul.f32 %v503, %v521
        %v541 = vmul.f32 %v503, %v525
        %v542 = vmul.f32 %v507, %v513
        %v543 = vmul.f32 %v507, %v517
        %v544 = vmul.f32 %v507, %v521
        %v545 = vmul.f32 %v507, %v525
        %v546 = vadd.f32 %v477, %v530
        %v547 = vadd.f32 %v478, %v531
        %v548 = vadd.f32 %v479, %v532
        %v549 = vadd.f32 %v480, %v533
        %v550 = vadd.f32 %v481, %v534
        %v551 = vadd.f32 %v482, %v535
        %v552 = vadd.f32 %v483, %v536
        %v553 = vadd.f32 %v484, %v537
        %v554 = vadd.f32 %v485, %v538
        %v555 = vadd.f32 %v486, %v539
        %v556 = vadd.f32 %v487, %v540
        %v557 = vadd.f32 %v488, %v541
        %v558 = vadd.f32 %v489, %v542
        %v559 = vadd.f32 %v490, %v543
        %v560 = vadd.f32 %v491, %v544
        %v561 = vadd.f32 %v492, %v545
        %562 = vset.pattern.permute.xlu0 2
        %563 = vperm.xlu0 %562, %v428
        %v564 = vpop.permute.xlu0 %563
        %566 = vset.pattern.permute.xlu0 2
        %567 = vperm.xlu0 %566, %v429
        %v568 = vpop.permute.xlu0 %567
        %570 = vset.pattern.permute.xlu0 2
        %571 = vperm.xlu0 %570, %v430
        %v572 = vpop.permute.xlu0 %571
        %574 = vset.pattern.permute.xlu0 2
        %575 = vperm.xlu0 %574, %v431
        %v576 = vpop.permute.xlu0 %575
        %v579 = vlaneseq
        %v580 = vshrl.u32 %v579, 7
        %v581 = vsub.s32 0, %v580
        %v582 = vrot.slane %v427, %v581
        %v583 = vlaneseq
        %v584 = vshrl.u32 %v583, 7
        %v585 = vsub.s32 1, %v584
        %v586 = vrot.slane %v427, %v585
        %v587 = vlaneseq
        %v588 = vshrl.u32 %v587, 7
        %v589 = vsub.s32 2, %v588
        %v590 = vrot.slane %v427, %v589
        %v591 = vlaneseq
        %v592 = vshrl.u32 %v591, 7
        %v593 = vsub.s32 3, %v592
        %v594 = vrot.slane %v427, %v593
        %v599 = vmul.f32 %v564, %v582
        %v600 = vmul.f32 %v564, %v586
        %v601 = vmul.f32 %v564, %v590
        %v602 = vmul.f32 %v564, %v594
        %v603 = vmul.f32 %v568, %v582
        %v604 = vmul.f32 %v568, %v586
        %v605 = vmul.f32 %v568, %v590
        %v606 = vmul.f32 %v568, %v594
        %v607 = vmul.f32 %v572, %v582
        %v608 = vmul.f32 %v572, %v586
        %v609 = vmul.f32 %v572, %v590
        %v610 = vmul.f32 %v572, %v594
        %v611 = vmul.f32 %v576, %v582
        %v612 = vmul.f32 %v576, %v586
        %v613 = vmul.f32 %v576, %v590
        %v614 = vmul.f32 %v576, %v594
        %v615 = vadd.f32 %v546, %v599
        %v616 = vadd.f32 %v547, %v600
        %v617 = vadd.f32 %v548, %v601
        %v618 = vadd.f32 %v549, %v602
        %v619 = vadd.f32 %v550, %v603
        %v620 = vadd.f32 %v551, %v604
        %v621 = vadd.f32 %v552, %v605
        %v622 = vadd.f32 %v553, %v606
        %v623 = vadd.f32 %v554, %v607
        %v624 = vadd.f32 %v555, %v608
        %v625 = vadd.f32 %v556, %v609
        %v626 = vadd.f32 %v557, %v610
        %v627 = vadd.f32 %v558, %v611
        %v628 = vadd.f32 %v559, %v612
        %v629 = vadd.f32 %v560, %v613
        %v630 = vadd.f32 %v561, %v614
        %632 = vset.pattern.permute.xlu0 0
        %633 = vperm.xlu0 %632, %v432
        %v634 = vpop.permute.xlu0 %633
        %637 = vset.pattern.permute.xlu0 0
        %638 = vperm.xlu0 %637, %v433
        %v639 = vpop.permute.xlu0 %638
        %642 = vset.pattern.permute.xlu0 0
        %643 = vperm.xlu0 %642, %v434
        %v644 = vpop.permute.xlu0 %643
        %647 = vset.pattern.permute.xlu0 0
        %648 = vperm.xlu0 %647, %v435
        %v649 = vpop.permute.xlu0 %648
        %v651 = vadd.f32 %v615, %v634
        %v652 = vadd.f32 %v616, %v634
        %v653 = vadd.f32 %v617, %v634
        %v654 = vadd.f32 %v618, %v634
        %v655 = vadd.f32 %v619, %v639
        %v656 = vadd.f32 %v620, %v639
        %v657 = vadd.f32 %v621, %v639
        %v658 = vadd.f32 %v622, %v639
        %v659 = vadd.f32 %v623, %v644
        %v660 = vadd.f32 %v624, %v644
        %v661 = vadd.f32 %v625, %v644
        %v662 = vadd.f32 %v626, %v644
        %v663 = vadd.f32 %v627, %v649
        %v664 = vadd.f32 %v628, %v649
        %v665 = vadd.f32 %v629, %v649
        %v666 = vadd.f32 %v630, %v649
        %v667 = vand.u32 2147483647, %v651
        %vm668 = vcmp.le.f32.partialorder %v667, 0.7853982
        %vm669 = vcmp.lt.s32.totalorder %v651, 0
        %v670 = vand.u32 %v651, 2139095040
        %v671 = vshrl.u32 %v670, 23
        %v672 = vsub.s32 %v671, 127
        %v673 = vand.u32 2147483647, %v651
        %v674 = vand.u32 %v673, 8388607
        %v675 = vor.u32 %v674, 8388608
        %v676 = vsub.s32 0, %v675
        %v677 = vadd.s32 %v672, 1
        %vm678 = vcmp.gt.s32.totalorder %v677, 0
        %v679 = vsel %vm678, %v677, 0
        %v680 = vshrl.u32 %v679, 5
        %v681 = vand.u32 %v679, 31
        %v682 = vsub.s32 32, %v681
        %v683 = vshrl.u32 683565275, %v682
        %v684 = vshll.u32 683565275, %v681
        %v685 = vshrl.u32 2475754826, %v682
        %v686 = vor.u32 %v684, %v685
        %v687 = vshll.u32 2475754826, %v681
        %v688 = vshrl.u32 2131351028, %v682
        %v689 = vor.u32 %v687, %v688
        %v690 = vshll.u32 2131351028, %v681
        %v691 = vshrl.u32 2102212464, %v682
        %v692 = vor.u32 %v690, %v691
        %v693 = vshll.u32 2102212464, %v681
        %v694 = vshrl.u32 920167782, %v682
        %v695 = vor.u32 %v693, %v694
        %v696 = vshll.u32 920167782, %v681
        %v697 = vshrl.u32 1326507024, %v682
        %v698 = vor.u32 %v696, %v697
        %vm699 = vcmp.lt.s32.totalorder %v680, 1
        %vm700 = vcmp.lt.s32.totalorder %v680, 2
        %vm701 = vcmp.lt.s32.totalorder %v680, 3
        %vm702 = vcmp.lt.s32.totalorder %v680, 4
        %v703 = vsel %vm699, %v683, %v686
        %v704 = vsel %vm702, %v692, 2102212464
        %v705 = vsel %vm701, %v689, %v704
        %v706 = vsel %vm700, %v703, %v705
        %v707 = vsel %vm699, %v686, %v689
        %v708 = vsel %vm702, %v695, 920167782
        %v709 = vsel %vm701, %v692, %v708
        %v710 = vsel %vm700, %v707, %v709
        %v711 = vsel %vm699, %v689, %v692
        %v712 = vsel %vm702, %v698, 1326507024
        %v713 = vsel %vm701, %v695, %v712
        %v714 = vsel %vm700, %v711, %v713
        %v715 = vshll.u32 %v675, 8
        %v716 = vmul.u32.u64.compose %v715, %v714
        %v717 = vextract.low.u32 %v716
        %v718 = vextract.high.u32 %v716
        %v719 = vmul.u32.u64.compose %v715, %v710
        %v720 = vextract.low.u32 %v719
        %v721 = vextract.high.u32 %v719
        %v722 = vmul.u32 %v715, %v706
        %v723 = vadd.s32 %v718, %v720
        %vm724 = vc.u32 %v718, %v720
        %v725 = vadd.s32 %v721, 1
        %v726 = vsel %vm724, %v725, %v721
        %v727 = vadd.s32 %v722, %v726
        %v728 = vadd.s32 %v727, 536870912
        %v729 = vshrl.u32 %v728, 30
        %v730 = vshll.u32 %v729, 30
        %v731 = vsub.s32 %v727, %v730
        %vm732 = vcmp.lt.s32.totalorder %v731, 0
        %v733 = vsub.s32 0, %v731
        %v734 = vsel %vm732, %v733, %v731
        %v735 = vclz %v734
        %v736 = vsub.s32 %v735, 2
        %vm737 = vcmp.gt.s32.totalorder 0, %v736
        %v738 = vsel %vm737, 0, %v736
        %v739 = vsub.s32 32, %v738
        %v740 = vshll.u32 %v731, %v738
        %v741 = vshrl.u32 %v723, %v739
        %v742 = vor.u32 %v740, %v741
        %v743 = vsub.s32 4294967266, %v738
        %v744 = vadd.s32 %v743, 127
        %v745 = vshll.u32 %v744, 23
        %v746 = vor.u32 4788187, %v745
        %v747 = vand.u32 2147483647, %v746
        %v749 = vcvt.s32.f32 %v742
        %v750 = vmul.f32 %v749, %v747
        %v751 = vxor.u32 %v750, 2147483648
        %v752 = vsel %vm669, %v751, %v750
        %v753 = vsub.s32 4, %v729
        %v754 = vsel %vm669, %v753, %v729
        %v755 = vsel %vm668, %v651, %v752
        %v756 = vsel %vm668, 0, %v754
        %v757 = vcosq.f32.pop %v755
        %v758 = vsinq.f32.pop %v755
        %vm759 = vweird.f32 %v651
        %v760 = vadd.s32 %v756, 3
        %v761 = vand.u32 %v760, 3
        %vm762 = vcmp.lt.s32.totalorder %v761, 2
        %vm763 = vcmp.eq.s32.totalorder %v761, 0
        %v764 = vxor.u32 %v758, 2147483648
        %v765 = vsel %vm763, %v757, %v764
        %vm766 = vcmp.eq.s32.totalorder %v761, 2
        %v767 = vxor.u32 %v757, 2147483648
        %v768 = vsel %vm766, %v767, %v758
        %v769 = vsel %vm762, %v765, %v768
        %v770 = vsel %vm759, nan, %v769
        %v771 = vand.u32 2147483647, %v652
        %vm772 = vcmp.le.f32.partialorder %v771, 0.7853982
        %vm773 = vcmp.lt.s32.totalorder %v652, 0
        %v774 = vand.u32 %v652, 2139095040
        %v775 = vshrl.u32 %v774, 23
        %v776 = vsub.s32 %v775, 127
        %v777 = vand.u32 2147483647, %v652
        %v778 = vand.u32 %v777, 8388607
        %v779 = vor.u32 %v778, 8388608
        %v780 = vsub.s32 0, %v779
        %v781 = vadd.s32 %v776, 1
        %vm782 = vcmp.gt.s32.totalorder %v781, 0
        %v783 = vsel %vm782, %v781, 0
        %v784 = vshrl.u32 %v783, 5
        %v785 = vand.u32 %v783, 31
        %v786 = vsub.s32 32, %v785
        %v787 = vshrl.u32 683565275, %v786
        %v788 = vshll.u32 683565275, %v785
        %v789 = vshrl.u32 2475754826, %v786
        %v790 = vor.u32 %v788, %v789
        %v791 = vshll.u32 2475754826, %v785
        %v792 = vshrl.u32 2131351028, %v786
        %v793 = vor.u32 %v791, %v792
        %v794 = vshll.u32 2131351028, %v785
        %v795 = vshrl.u32 2102212464, %v786
        %v796 = vor.u32 %v794, %v795
        %v797 = vshll.u32 2102212464, %v785
        %v798 = vshrl.u32 920167782, %v786
        %v799 = vor.u32 %v797, %v798
        %v800 = vshll.u32 920167782, %v785
        %v801 = vshrl.u32 1326507024, %v786
        %v802 = vor.u32 %v800, %v801
        %vm803 = vcmp.lt.s32.totalorder %v784, 1
        %vm804 = vcmp.lt.s32.totalorder %v784, 2
        %vm805 = vcmp.lt.s32.totalorder %v784, 3
        %vm806 = vcmp.lt.s32.totalorder %v784, 4
        %v807 = vsel %vm803, %v787, %v790
        %v808 = vsel %vm806, %v796, 2102212464
        %v809 = vsel %vm805, %v793, %v808
        %v810 = vsel %vm804, %v807, %v809
        %v811 = vsel %vm803, %v790, %v793
        %v812 = vsel %vm806, %v799, 920167782
        %v813 = vsel %vm805, %v796, %v812
        %v814 = vsel %vm804, %v811, %v813
        %v815 = vsel %vm803, %v793, %v796
        %v816 = vsel %vm806, %v802, 1326507024
        %v817 = vsel %vm805, %v799, %v816
        %v818 = vsel %vm804, %v815, %v817
        %v819 = vshll.u32 %v779, 8
        %v820 = vmul.u32.u64.compose %v819, %v818
        %v821 = vextract.low.u32 %v820
        %v822 = vextract.high.u32 %v820
        %v823 = vmul.u32.u64.compose %v819, %v814
        %v824 = vextract.low.u32 %v823
        %v825 = vextract.high.u32 %v823
        %v826 = vmul.u32 %v819, %v810
        %v827 = vadd.s32 %v822, %v824
        %vm828 = vc.u32 %v822, %v824
        %v829 = vadd.s32 %v825, 1
        %v830 = vsel %vm828, %v829, %v825
        %v831 = vadd.s32 %v826, %v830
        %v832 = vadd.s32 %v831, 536870912
        %v833 = vshrl.u32 %v832, 30
        %v834 = vshll.u32 %v833, 30
        %v835 = vsub.s32 %v831, %v834
        %vm836 = vcmp.lt.s32.totalorder %v835, 0
        %v837 = vsub.s32 0, %v835
        %v838 = vsel %vm836, %v837, %v835
        %v839 = vclz %v838
        %v840 = vsub.s32 %v839, 2
        %vm841 = vcmp.gt.s32.totalorder 0, %v840
        %v842 = vsel %vm841, 0, %v840
        %v843 = vsub.s32 32, %v842
        %v844 = vshll.u32 %v835, %v842
        %v845 = vshrl.u32 %v827, %v843
        %v846 = vor.u32 %v844, %v845
        %v847 = vsub.s32 4294967266, %v842
        %v848 = vadd.s32 %v847, 127
        %v849 = vshll.u32 %v848, 23
        %v850 = vor.u32 4788187, %v849
        %v851 = vand.u32 2147483647, %v850
        %v853 = vcvt.s32.f32 %v846
        %v854 = vmul.f32 %v853, %v851
        %v855 = vxor.u32 %v854, 2147483648
        %v856 = vsel %vm773, %v855, %v854
        %v857 = vsub.s32 4, %v833
        %v858 = vsel %vm773, %v857, %v833
        %v859 = vsel %vm772, %v652, %v856
        %v860 = vsel %vm772, 0, %v858
        %v861 = vcosq.f32.pop %v859
        %v862 = vsinq.f32.pop %v859
        %vm863 = vweird.f32 %v652
        %v864 = vadd.s32 %v860, 3
        %v865 = vand.u32 %v864, 3
        %vm866 = vcmp.lt.s32.totalorder %v865, 2
        %vm867 = vcmp.eq.s32.totalorder %v865, 0
        %v868 = vxor.u32 %v862, 2147483648
        %v869 = vsel %vm867, %v861, %v868
        %vm870 = vcmp.eq.s32.totalorder %v865, 2
        %v871 = vxor.u32 %v861, 2147483648
        %v872 = vsel %vm870, %v871, %v862
        %v873 = vsel %vm866, %v869, %v872
        %v874 = vsel %vm863, nan, %v873
        %v875 = vand.u32 2147483647, %v653
        %vm876 = vcmp.le.f32.partialorder %v875, 0.7853982
        %vm877 = vcmp.lt.s32.totalorder %v653, 0
        %v878 = vand.u32 %v653, 2139095040
        %v879 = vshrl.u32 %v878, 23
        %v880 = vsub.s32 %v879, 127
        %v881 = vand.u32 2147483647, %v653
        %v882 = vand.u32 %v881, 8388607
        %v883 = vor.u32 %v882, 8388608
        %v884 = vsub.s32 0, %v883
        %v885 = vadd.s32 %v880, 1
        %vm886 = vcmp.gt.s32.totalorder %v885, 0
        %v887 = vsel %vm886, %v885, 0
        %v888 = vshrl.u32 %v887, 5
        %v889 = vand.u32 %v887, 31
        %v890 = vsub.s32 32, %v889
        %v891 = vshrl.u32 683565275, %v890
        %v892 = vshll.u32 683565275, %v889
        %v893 = vshrl.u32 2475754826, %v890
        %v894 = vor.u32 %v892, %v893
        %v895 = vshll.u32 2475754826, %v889
        %v896 = vshrl.u32 2131351028, %v890
        %v897 = vor.u32 %v895, %v896
        %v898 = vshll.u32 2131351028, %v889
        %v899 = vshrl.u32 2102212464, %v890
        %v900 = vor.u32 %v898, %v899
        %v901 = vshll.u32 2102212464, %v889
        %v902 = vshrl.u32 920167782, %v890
        %v903 = vor.u32 %v901, %v902
        %v904 = vshll.u32 920167782, %v889
        %v905 = vshrl.u32 1326507024, %v890
        %v906 = vor.u32 %v904, %v905
        %vm907 = vcmp.lt.s32.totalorder %v888, 1
        %vm908 = vcmp.lt.s32.totalorder %v888, 2
        %vm909 = vcmp.lt.s32.totalorder %v888, 3
        %vm910 = vcmp.lt.s32.totalorder %v888, 4
        %v911 = vsel %vm907, %v891, %v894
        %v912 = vsel %vm910, %v900, 2102212464
        %v913 = vsel %vm909, %v897, %v912
        %v914 = vsel %vm908, %v911, %v913
        %v915 = vsel %vm907, %v894, %v897
        %v916 = vsel %vm910, %v903, 920167782
        %v917 = vsel %vm909, %v900, %v916
        %v918 = vsel %vm908, %v915, %v917
        %v919 = vsel %vm907, %v897, %v900
        %v920 = vsel %vm910, %v906, 1326507024
        %v921 = vsel %vm909, %v903, %v920
        %v922 = vsel %vm908, %v919, %v921
        %v923 = vshll.u32 %v883, 8
        %v924 = vmul.u32.u64.compose %v923, %v922
        %v925 = vextract.low.u32 %v924
        %v926 = vextract.high.u32 %v924
        %v927 = vmul.u32.u64.compose %v923, %v918
        %v928 = vextract.low.u32 %v927
        %v929 = vextract.high.u32 %v927
        %v930 = vmul.u32 %v923, %v914
        %v931 = vadd.s32 %v926, %v928
        %vm932 = vc.u32 %v926, %v928
        %v933 = vadd.s32 %v929, 1
        %v934 = vsel %vm932, %v933, %v929
        %v935 = vadd.s32 %v930, %v934
        %v936 = vadd.s32 %v935, 536870912
        %v937 = vshrl.u32 %v936, 30
        %v938 = vshll.u32 %v937, 30
        %v939 = vsub.s32 %v935, %v938
        %vm940 = vcmp.lt.s32.totalorder %v939, 0
        %v941 = vsub.s32 0, %v939
        %v942 = vsel %vm940, %v941, %v939
        %v943 = vclz %v942
        %v944 = vsub.s32 %v943, 2
        %vm945 = vcmp.gt.s32.totalorder 0, %v944
        %v946 = vsel %vm945, 0, %v944
        %v947 = vsub.s32 32, %v946
        %v948 = vshll.u32 %v939, %v946
        %v949 = vshrl.u32 %v931, %v947
        %v950 = vor.u32 %v948, %v949
        %v951 = vsub.s32 4294967266, %v946
        %v952 = vadd.s32 %v951, 127
        %v953 = vshll.u32 %v952, 23
        %v954 = vor.u32 4788187, %v953
        %v955 = vand.u32 2147483647, %v954
        %v957 = vcvt.s32.f32 %v950
        %v958 = vmul.f32 %v957, %v955
        %v959 = vxor.u32 %v958, 2147483648
        %v960 = vsel %vm877, %v959, %v958
        %v961 = vsub.s32 4, %v937
        %v962 = vsel %vm877, %v961, %v937
        %v963 = vsel %vm876, %v653, %v960
        %v964 = vsel %vm876, 0, %v962
        %v965 = vcosq.f32.pop %v963
        %v966 = vsinq.f32.pop %v963
        %vm967 = vweird.f32 %v653
        %v968 = vadd.s32 %v964, 3
        %v969 = vand.u32 %v968, 3
        %vm970 = vcmp.lt.s32.totalorder %v969, 2
        %vm971 = vcmp.eq.s32.totalorder %v969, 0
        %v972 = vxor.u32 %v966, 2147483648
        %v973 = vsel %vm971, %v965, %v972
        %vm974 = vcmp.eq.s32.totalorder %v969, 2
        %v975 = vxor.u32 %v965, 2147483648
        %v976 = vsel %vm974, %v975, %v966
        %v977 = vsel %vm970, %v973, %v976
        %v978 = vsel %vm967, nan, %v977
        %v979 = vand.u32 2147483647, %v654
        %vm980 = vcmp.le.f32.partialorder %v979, 0.7853982
        %vm981 = vcmp.lt.s32.totalorder %v654, 0
        %v982 = vand.u32 %v654, 2139095040
        %v983 = vshrl.u32 %v982, 23
        %v984 = vsub.s32 %v983, 127
        %v985 = vand.u32 2147483647, %v654
        %v986 = vand.u32 %v985, 8388607
        %v987 = vor.u32 %v986, 8388608
        %v988 = vsub.s32 0, %v987
        %v989 = vadd.s32 %v984, 1
        %vm990 = vcmp.gt.s32.totalorder %v989, 0
        %v991 = vsel %vm990, %v989, 0
        %v992 = vshrl.u32 %v991, 5
        %v993 = vand.u32 %v991, 31
        %v994 = vsub.s32 32, %v993
        %v995 = vshrl.u32 683565275, %v994
        %v996 = vshll.u32 683565275, %v993
        %v997 = vshrl.u32 2475754826, %v994
        %v998 = vor.u32 %v996, %v997
        %v999 = vshll.u32 2475754826, %v993
        %v1000 = vshrl.u32 2131351028, %v994
        %v1001 = vor.u32 %v999, %v1000
        %v1002 = vshll.u32 2131351028, %v993
        %v1003 = vshrl.u32 2102212464, %v994
        %v1004 = vor.u32 %v1002, %v1003
        %v1005 = vshll.u32 2102212464, %v993
        %v1006 = vshrl.u32 920167782, %v994
        %v1007 = vor.u32 %v1005, %v1006
        %v1008 = vshll.u32 920167782, %v993
        %v1009 = vshrl.u32 1326507024, %v994
        %v1010 = vor.u32 %v1008, %v1009
        %vm1011 = vcmp.lt.s32.totalorder %v992, 1
        %vm1012 = vcmp.lt.s32.totalorder %v992, 2
        %vm1013 = vcmp.lt.s32.totalorder %v992, 3
        %vm1014 = vcmp.lt.s32.totalorder %v992, 4
        %v1015 = vsel %vm1011, %v995, %v998
        %v1016 = vsel %vm1014, %v1004, 2102212464
        %v1017 = vsel %vm1013, %v1001, %v1016
        %v1018 = vsel %vm1012, %v1015, %v1017
        %v1019 = vsel %vm1011, %v998, %v1001
        %v1020 = vsel %vm1014, %v1007, 920167782
        %v1021 = vsel %vm1013, %v1004, %v1020
        %v1022 = vsel %vm1012, %v1019, %v1021
        %v1023 = vsel %vm1011, %v1001, %v1004
        %v1024 = vsel %vm1014, %v1010, 1326507024
        %v1025 = vsel %vm1013, %v1007, %v1024
        %v1026 = vsel %vm1012, %v1023, %v1025
        %v1027 = vshll.u32 %v987, 8
        %v1028 = vmul.u32.u64.compose %v1027, %v1026
        %v1029 = vextract.low.u32 %v1028
        %v1030 = vextract.high.u32 %v1028
        %v1031 = vmul.u32.u64.compose %v1027, %v1022
        %v1032 = vextract.low.u32 %v1031
        %v1033 = vextract.high.u32 %v1031
        %v1034 = vmul.u32 %v1027, %v1018
        %v1035 = vadd.s32 %v1030, %v1032
        %vm1036 = vc.u32 %v1030, %v1032
        %v1037 = vadd.s32 %v1033, 1
        %v1038 = vsel %vm1036, %v1037, %v1033
        %v1039 = vadd.s32 %v1034, %v1038
        %v1040 = vadd.s32 %v1039, 536870912
        %v1041 = vshrl.u32 %v1040, 30
        %v1042 = vshll.u32 %v1041, 30
        %v1043 = vsub.s32 %v1039, %v1042
        %vm1044 = vcmp.lt.s32.totalorder %v1043, 0
        %v1045 = vsub.s32 0, %v1043
        %v1046 = vsel %vm1044, %v1045, %v1043
        %v1047 = vclz %v1046
        %v1048 = vsub.s32 %v1047, 2
        %vm1049 = vcmp.gt.s32.totalorder 0, %v1048
        %v1050 = vsel %vm1049, 0, %v1048
        %v1051 = vsub.s32 32, %v1050
        %v1052 = vshll.u32 %v1043, %v1050
        %v1053 = vshrl.u32 %v1035, %v1051
        %v1054 = vor.u32 %v1052, %v1053
        %v1055 = vsub.s32 4294967266, %v1050
        %v1056 = vadd.s32 %v1055, 127
        %v1057 = vshll.u32 %v1056, 23
        %v1058 = vor.u32 4788187, %v1057
        %v1059 = vand.u32 2147483647, %v1058
        %v1061 = vcvt.s32.f32 %v1054
        %v1062 = vmul.f32 %v1061, %v1059
        %v1063 = vxor.u32 %v1062, 2147483648
        %v1064 = vsel %vm981, %v1063, %v1062
        %v1065 = vsub.s32 4, %v1041
        %v1066 = vsel %vm981, %v1065, %v1041
        %v1067 = vsel %vm980, %v654, %v1064
        %v1068 = vsel %vm980, 0, %v1066
        %v1069 = vcosq.f32.pop %v1067
        %v1070 = vsinq.f32.pop %v1067
        %vm1071 = vweird.f32 %v654
        %v1072 = vadd.s32 %v1068, 3
        %v1073 = vand.u32 %v1072, 3
        %vm1074 = vcmp.lt.s32.totalorder %v1073, 2
        %vm1075 = vcmp.eq.s32.totalorder %v1073, 0
        %v1076 = vxor.u32 %v1070, 2147483648
        %v1077 = vsel %vm1075, %v1069, %v1076
        %vm1078 = vcmp.eq.s32.totalorder %v1073, 2
        %v1079 = vxor.u32 %v1069, 2147483648
        %v1080 = vsel %vm1078, %v1079, %v1070
        %v1081 = vsel %vm1074, %v1077, %v1080
        %v1082 = vsel %vm1071, nan, %v1081
        %v1083 = vand.u32 2147483647, %v655
        %vm1084 = vcmp.le.f32.partialorder %v1083, 0.7853982
        %vm1085 = vcmp.lt.s32.totalorder %v655, 0
        %v1086 = vand.u32 %v655, 2139095040
        %v1087 = vshrl.u32 %v1086, 23
        %v1088 = vsub.s32 %v1087, 127
        %v1089 = vand.u32 2147483647, %v655
        %v1090 = vand.u32 %v1089, 8388607
        %v1091 = vor.u32 %v1090, 8388608
        %v1092 = vsub.s32 0, %v1091
        %v1093 = vadd.s32 %v1088, 1
        %vm1094 = vcmp.gt.s32.totalorder %v1093, 0
        %v1095 = vsel %vm1094, %v1093, 0
        %v1096 = vshrl.u32 %v1095, 5
        %v1097 = vand.u32 %v1095, 31
        %v1098 = vsub.s32 32, %v1097
        %v1099 = vshrl.u32 683565275, %v1098
        %v1100 = vshll.u32 683565275, %v1097
        %v1101 = vshrl.u32 2475754826, %v1098
        %v1102 = vor.u32 %v1100, %v1101
        %v1103 = vshll.u32 2475754826, %v1097
        %v1104 = vshrl.u32 2131351028, %v1098
        %v1105 = vor.u32 %v1103, %v1104
        %v1106 = vshll.u32 2131351028, %v1097
        %v1107 = vshrl.u32 2102212464, %v1098
        %v1108 = vor.u32 %v1106, %v1107
        %v1109 = vshll.u32 2102212464, %v1097
        %v1110 = vshrl.u32 920167782, %v1098
        %v1111 = vor.u32 %v1109, %v1110
        %v1112 = vshll.u32 920167782, %v1097
        %v1113 = vshrl.u32 1326507024, %v1098
        %v1114 = vor.u32 %v1112, %v1113
        %vm1115 = vcmp.lt.s32.totalorder %v1096, 1
        %vm1116 = vcmp.lt.s32.totalorder %v1096, 2
        %vm1117 = vcmp.lt.s32.totalorder %v1096, 3
        %vm1118 = vcmp.lt.s32.totalorder %v1096, 4
        %v1119 = vsel %vm1115, %v1099, %v1102
        %v1120 = vsel %vm1118, %v1108, 2102212464
        %v1121 = vsel %vm1117, %v1105, %v1120
        %v1122 = vsel %vm1116, %v1119, %v1121
        %v1123 = vsel %vm1115, %v1102, %v1105
        %v1124 = vsel %vm1118, %v1111, 920167782
        %v1125 = vsel %vm1117, %v1108, %v1124
        %v1126 = vsel %vm1116, %v1123, %v1125
        %v1127 = vsel %vm1115, %v1105, %v1108
        %v1128 = vsel %vm1118, %v1114, 1326507024
        %v1129 = vsel %vm1117, %v1111, %v1128
        %v1130 = vsel %vm1116, %v1127, %v1129
        %v1131 = vshll.u32 %v1091, 8
        %v1132 = vmul.u32.u64.compose %v1131, %v1130
        %v1133 = vextract.low.u32 %v1132
        %v1134 = vextract.high.u32 %v1132
        %v1135 = vmul.u32.u64.compose %v1131, %v1126
        %v1136 = vextract.low.u32 %v1135
        %v1137 = vextract.high.u32 %v1135
        %v1138 = vmul.u32 %v1131, %v1122
        %v1139 = vadd.s32 %v1134, %v1136
        %vm1140 = vc.u32 %v1134, %v1136
        %v1141 = vadd.s32 %v1137, 1
        %v1142 = vsel %vm1140, %v1141, %v1137
        %v1143 = vadd.s32 %v1138, %v1142
        %v1144 = vadd.s32 %v1143, 536870912
        %v1145 = vshrl.u32 %v1144, 30
        %v1146 = vshll.u32 %v1145, 30
        %v1147 = vsub.s32 %v1143, %v1146
        %vm1148 = vcmp.lt.s32.totalorder %v1147, 0
        %v1149 = vsub.s32 0, %v1147
        %v1150 = vsel %vm1148, %v1149, %v1147
        %v1151 = vclz %v1150
        %v1152 = vsub.s32 %v1151, 2
        %vm1153 = vcmp.gt.s32.totalorder 0, %v1152
        %v1154 = vsel %vm1153, 0, %v1152
        %v1155 = vsub.s32 32, %v1154
        %v1156 = vshll.u32 %v1147, %v1154
        %v1157 = vshrl.u32 %v1139, %v1155
        %v1158 = vor.u32 %v1156, %v1157
        %v1159 = vsub.s32 4294967266, %v1154
        %v1160 = vadd.s32 %v1159, 127
        %v1161 = vshll.u32 %v1160, 23
        %v1162 = vor.u32 4788187, %v1161
        %v1163 = vand.u32 2147483647, %v1162
        %v1165 = vcvt.s32.f32 %v1158
        %v1166 = vmul.f32 %v1165, %v1163
        %v1167 = vxor.u32 %v1166, 2147483648
        %v1168 = vsel %vm1085, %v1167, %v1166
        %v1169 = vsub.s32 4, %v1145
        %v1170 = vsel %vm1085, %v1169, %v1145
        %v1171 = vsel %vm1084, %v655, %v1168
        %v1172 = vsel %vm1084, 0, %v1170
        %v1173 = vcosq.f32.pop %v1171
        %v1174 = vsinq.f32.pop %v1171
        %vm1175 = vweird.f32 %v655
        %v1176 = vadd.s32 %v1172, 3
        %v1177 = vand.u32 %v1176, 3
        %vm1178 = vcmp.lt.s32.totalorder %v1177, 2
        %vm1179 = vcmp.eq.s32.totalorder %v1177, 0
        %v1180 = vxor.u32 %v1174, 2147483648
        %v1181 = vsel %vm1179, %v1173, %v1180
        %vm1182 = vcmp.eq.s32.totalorder %v1177, 2
        %v1183 = vxor.u32 %v1173, 2147483648
        %v1184 = vsel %vm1182, %v1183, %v1174
        %v1185 = vsel %vm1178, %v1181, %v1184
        %v1186 = vsel %vm1175, nan, %v1185
        %v1187 = vand.u32 2147483647, %v656
        %vm1188 = vcmp.le.f32.partialorder %v1187, 0.7853982
        %vm1189 = vcmp.lt.s32.totalorder %v656, 0
        %v1190 = vand.u32 %v656, 2139095040
        %v1191 = vshrl.u32 %v1190, 23
        %v1192 = vsub.s32 %v1191, 127
        %v1193 = vand.u32 2147483647, %v656
        %v1194 = vand.u32 %v1193, 8388607
        %v1195 = vor.u32 %v1194, 8388608
        %v1196 = vsub.s32 0, %v1195
        %v1197 = vadd.s32 %v1192, 1
        %vm1198 = vcmp.gt.s32.totalorder %v1197, 0
        %v1199 = vsel %vm1198, %v1197, 0
        %v1200 = vshrl.u32 %v1199, 5
        %v1201 = vand.u32 %v1199, 31
        %v1202 = vsub.s32 32, %v1201
        %v1203 = vshrl.u32 683565275, %v1202
        %v1204 = vshll.u32 683565275, %v1201
        %v1205 = vshrl.u32 2475754826, %v1202
        %v1206 = vor.u32 %v1204, %v1205
        %v1207 = vshll.u32 2475754826, %v1201
        %v1208 = vshrl.u32 2131351028, %v1202
        %v1209 = vor.u32 %v1207, %v1208
        %v1210 = vshll.u32 2131351028, %v1201
        %v1211 = vshrl.u32 2102212464, %v1202
        %v1212 = vor.u32 %v1210, %v1211
        %v1213 = vshll.u32 2102212464, %v1201
        %v1214 = vshrl.u32 920167782, %v1202
        %v1215 = vor.u32 %v1213, %v1214
        %v1216 = vshll.u32 920167782, %v1201
        %v1217 = vshrl.u32 1326507024, %v1202
        %v1218 = vor.u32 %v1216, %v1217
        %vm1219 = vcmp.lt.s32.totalorder %v1200, 1
        %vm1220 = vcmp.lt.s32.totalorder %v1200, 2
        %vm1221 = vcmp.lt.s32.totalorder %v1200, 3
        %vm1222 = vcmp.lt.s32.totalorder %v1200, 4
        %v1223 = vsel %vm1219, %v1203, %v1206
        %v1224 = vsel %vm1222, %v1212, 2102212464
        %v1225 = vsel %vm1221, %v1209, %v1224
        %v1226 = vsel %vm1220, %v1223, %v1225
        %v1227 = vsel %vm1219, %v1206, %v1209
        %v1228 = vsel %vm1222, %v1215, 920167782
        %v1229 = vsel %vm1221, %v1212, %v1228
        %v1230 = vsel %vm1220, %v1227, %v1229
        %v1231 = vsel %vm1219, %v1209, %v1212
        %v1232 = vsel %vm1222, %v1218, 1326507024
        %v1233 = vsel %vm1221, %v1215, %v1232
        %v1234 = vsel %vm1220, %v1231, %v1233
        %v1235 = vshll.u32 %v1195, 8
        %v1236 = vmul.u32.u64.compose %v1235, %v1234
        %v1237 = vextract.low.u32 %v1236
        %v1238 = vextract.high.u32 %v1236
        %v1239 = vmul.u32.u64.compose %v1235, %v1230
        %v1240 = vextract.low.u32 %v1239
        %v1241 = vextract.high.u32 %v1239
        %v1242 = vmul.u32 %v1235, %v1226
        %v1243 = vadd.s32 %v1238, %v1240
        %vm1244 = vc.u32 %v1238, %v1240
        %v1245 = vadd.s32 %v1241, 1
        %v1246 = vsel %vm1244, %v1245, %v1241
        %v1247 = vadd.s32 %v1242, %v1246
        %v1248 = vadd.s32 %v1247, 536870912
        %v1249 = vshrl.u32 %v1248, 30
        %v1250 = vshll.u32 %v1249, 30
        %v1251 = vsub.s32 %v1247, %v1250
        %vm1252 = vcmp.lt.s32.totalorder %v1251, 0
        %v1253 = vsub.s32 0, %v1251
        %v1254 = vsel %vm1252, %v1253, %v1251
        %v1255 = vclz %v1254
        %v1256 = vsub.s32 %v1255, 2
        %vm1257 = vcmp.gt.s32.totalorder 0, %v1256
        %v1258 = vsel %vm1257, 0, %v1256
        %v1259 = vsub.s32 32, %v1258
        %v1260 = vshll.u32 %v1251, %v1258
        %v1261 = vshrl.u32 %v1243, %v1259
        %v1262 = vor.u32 %v1260, %v1261
        %v1263 = vsub.s32 4294967266, %v1258
        %v1264 = vadd.s32 %v1263, 127
        %v1265 = vshll.u32 %v1264, 23
        %v1266 = vor.u32 4788187, %v1265
        %v1267 = vand.u32 2147483647, %v1266
        %v1269 = vcvt.s32.f32 %v1262
        %v1270 = vmul.f32 %v1269, %v1267
        %v1271 = vxor.u32 %v1270, 2147483648
        %v1272 = vsel %vm1189, %v1271, %v1270
        %v1273 = vsub.s32 4, %v1249
        %v1274 = vsel %vm1189, %v1273, %v1249
        %v1275 = vsel %vm1188, %v656, %v1272
        %v1276 = vsel %vm1188, 0, %v1274
        %v1277 = vcosq.f32.pop %v1275
        %v1278 = vsinq.f32.pop %v1275
        %vm1279 = vweird.f32 %v656
        %v1280 = vadd.s32 %v1276, 3
        %v1281 = vand.u32 %v1280, 3
        %vm1282 = vcmp.lt.s32.totalorder %v1281, 2
        %vm1283 = vcmp.eq.s32.totalorder %v1281, 0
        %v1284 = vxor.u32 %v1278, 2147483648
        %v1285 = vsel %vm1283, %v1277, %v1284
        %vm1286 = vcmp.eq.s32.totalorder %v1281, 2
        %v1287 = vxor.u32 %v1277, 2147483648
        %v1288 = vsel %vm1286, %v1287, %v1278
        %v1289 = vsel %vm1282, %v1285, %v1288
        %v1290 = vsel %vm1279, nan, %v1289
        %v1291 = vand.u32 2147483647, %v657
        %vm1292 = vcmp.le.f32.partialorder %v1291, 0.7853982
        %vm1293 = vcmp.lt.s32.totalorder %v657, 0
        %v1294 = vand.u32 %v657, 2139095040
        %v1295 = vshrl.u32 %v1294, 23
        %v1296 = vsub.s32 %v1295, 127
        %v1297 = vand.u32 2147483647, %v657
        %v1298 = vand.u32 %v1297, 8388607
        %v1299 = vor.u32 %v1298, 8388608
        %v1300 = vsub.s32 0, %v1299
        %v1301 = vadd.s32 %v1296, 1
        %vm1302 = vcmp.gt.s32.totalorder %v1301, 0
        %v1303 = vsel %vm1302, %v1301, 0
        %v1304 = vshrl.u32 %v1303, 5
        %v1305 = vand.u32 %v1303, 31
        %v1306 = vsub.s32 32, %v1305
        %v1307 = vshrl.u32 683565275, %v1306
        %v1308 = vshll.u32 683565275, %v1305
        %v1309 = vshrl.u32 2475754826, %v1306
        %v1310 = vor.u32 %v1308, %v1309
        %v1311 = vshll.u32 2475754826, %v1305
        %v1312 = vshrl.u32 2131351028, %v1306
        %v1313 = vor.u32 %v1311, %v1312
        %v1314 = vshll.u32 2131351028, %v1305
        %v1315 = vshrl.u32 2102212464, %v1306
        %v1316 = vor.u32 %v1314, %v1315
        %v1317 = vshll.u32 2102212464, %v1305
        %v1318 = vshrl.u32 920167782, %v1306
        %v1319 = vor.u32 %v1317, %v1318
        %v1320 = vshll.u32 920167782, %v1305
        %v1321 = vshrl.u32 1326507024, %v1306
        %v1322 = vor.u32 %v1320, %v1321
        %vm1323 = vcmp.lt.s32.totalorder %v1304, 1
        %vm1324 = vcmp.lt.s32.totalorder %v1304, 2
        %vm1325 = vcmp.lt.s32.totalorder %v1304, 3
        %vm1326 = vcmp.lt.s32.totalorder %v1304, 4
        %v1327 = vsel %vm1323, %v1307, %v1310
        %v1328 = vsel %vm1326, %v1316, 2102212464
        %v1329 = vsel %vm1325, %v1313, %v1328
        %v1330 = vsel %vm1324, %v1327, %v1329
        %v1331 = vsel %vm1323, %v1310, %v1313
        %v1332 = vsel %vm1326, %v1319, 920167782
        %v1333 = vsel %vm1325, %v1316, %v1332
        %v1334 = vsel %vm1324, %v1331, %v1333
        %v1335 = vsel %vm1323, %v1313, %v1316
        %v1336 = vsel %vm1326, %v1322, 1326507024
        %v1337 = vsel %vm1325, %v1319, %v1336
        %v1338 = vsel %vm1324, %v1335, %v1337
        %v1339 = vshll.u32 %v1299, 8
        %v1340 = vmul.u32.u64.compose %v1339, %v1338
        %v1341 = vextract.low.u32 %v1340
        %v1342 = vextract.high.u32 %v1340
        %v1343 = vmul.u32.u64.compose %v1339, %v1334
        %v1344 = vextract.low.u32 %v1343
        %v1345 = vextract.high.u32 %v1343
        %v1346 = vmul.u32 %v1339, %v1330
        %v1347 = vadd.s32 %v1342, %v1344
        %vm1348 = vc.u32 %v1342, %v1344
        %v1349 = vadd.s32 %v1345, 1
        %v1350 = vsel %vm1348, %v1349, %v1345
        %v1351 = vadd.s32 %v1346, %v1350
        %v1352 = vadd.s32 %v1351, 536870912
        %v1353 = vshrl.u32 %v1352, 30
        %v1354 = vshll.u32 %v1353, 30
        %v1355 = vsub.s32 %v1351, %v1354
        %vm1356 = vcmp.lt.s32.totalorder %v1355, 0
        %v1357 = vsub.s32 0, %v1355
        %v1358 = vsel %vm1356, %v1357, %v1355
        %v1359 = vclz %v1358
        %v1360 = vsub.s32 %v1359, 2
        %vm1361 = vcmp.gt.s32.totalorder 0, %v1360
        %v1362 = vsel %vm1361, 0, %v1360
        %v1363 = vsub.s32 32, %v1362
        %v1364 = vshll.u32 %v1355, %v1362
        %v1365 = vshrl.u32 %v1347, %v1363
        %v1366 = vor.u32 %v1364, %v1365
        %v1367 = vsub.s32 4294967266, %v1362
        %v1368 = vadd.s32 %v1367, 127
        %v1369 = vshll.u32 %v1368, 23
        %v1370 = vor.u32 4788187, %v1369
        %v1371 = vand.u32 2147483647, %v1370
        %v1373 = vcvt.s32.f32 %v1366
        %v1374 = vmul.f32 %v1373, %v1371
        %v1375 = vxor.u32 %v1374, 2147483648
        %v1376 = vsel %vm1293, %v1375, %v1374
        %v1377 = vsub.s32 4, %v1353
        %v1378 = vsel %vm1293, %v1377, %v1353
        %v1379 = vsel %vm1292, %v657, %v1376
        %v1380 = vsel %vm1292, 0, %v1378
        %v1381 = vcosq.f32.pop %v1379
        %v1382 = vsinq.f32.pop %v1379
        %vm1383 = vweird.f32 %v657
        %v1384 = vadd.s32 %v1380, 3
        %v1385 = vand.u32 %v1384, 3
        %vm1386 = vcmp.lt.s32.totalorder %v1385, 2
        %vm1387 = vcmp.eq.s32.totalorder %v1385, 0
        %v1388 = vxor.u32 %v1382, 2147483648
        %v1389 = vsel %vm1387, %v1381, %v1388
        %vm1390 = vcmp.eq.s32.totalorder %v1385, 2
        %v1391 = vxor.u32 %v1381, 2147483648
        %v1392 = vsel %vm1390, %v1391, %v1382
        %v1393 = vsel %vm1386, %v1389, %v1392
        %v1394 = vsel %vm1383, nan, %v1393
        %v1395 = vand.u32 2147483647, %v658
        %vm1396 = vcmp.le.f32.partialorder %v1395, 0.7853982
        %vm1397 = vcmp.lt.s32.totalorder %v658, 0
        %v1398 = vand.u32 %v658, 2139095040
        %v1399 = vshrl.u32 %v1398, 23
        %v1400 = vsub.s32 %v1399, 127
        %v1401 = vand.u32 2147483647, %v658
        %v1402 = vand.u32 %v1401, 8388607
        %v1403 = vor.u32 %v1402, 8388608
        %v1404 = vsub.s32 0, %v1403
        %v1405 = vadd.s32 %v1400, 1
        %vm1406 = vcmp.gt.s32.totalorder %v1405, 0
        %v1407 = vsel %vm1406, %v1405, 0
        %v1408 = vshrl.u32 %v1407, 5
        %v1409 = vand.u32 %v1407, 31
        %v1410 = vsub.s32 32, %v1409
        %v1411 = vshrl.u32 683565275, %v1410
        %v1412 = vshll.u32 683565275, %v1409
        %v1413 = vshrl.u32 2475754826, %v1410
        %v1414 = vor.u32 %v1412, %v1413
        %v1415 = vshll.u32 2475754826, %v1409
        %v1416 = vshrl.u32 2131351028, %v1410
        %v1417 = vor.u32 %v1415, %v1416
        %v1418 = vshll.u32 2131351028, %v1409
        %v1419 = vshrl.u32 2102212464, %v1410
        %v1420 = vor.u32 %v1418, %v1419
        %v1421 = vshll.u32 2102212464, %v1409
        %v1422 = vshrl.u32 920167782, %v1410
        %v1423 = vor.u32 %v1421, %v1422
        %v1424 = vshll.u32 920167782, %v1409
        %v1425 = vshrl.u32 1326507024, %v1410
        %v1426 = vor.u32 %v1424, %v1425
        %vm1427 = vcmp.lt.s32.totalorder %v1408, 1
        %vm1428 = vcmp.lt.s32.totalorder %v1408, 2
        %vm1429 = vcmp.lt.s32.totalorder %v1408, 3
        %vm1430 = vcmp.lt.s32.totalorder %v1408, 4
        %v1431 = vsel %vm1427, %v1411, %v1414
        %v1432 = vsel %vm1430, %v1420, 2102212464
        %v1433 = vsel %vm1429, %v1417, %v1432
        %v1434 = vsel %vm1428, %v1431, %v1433
        %v1435 = vsel %vm1427, %v1414, %v1417
        %v1436 = vsel %vm1430, %v1423, 920167782
        %v1437 = vsel %vm1429, %v1420, %v1436
        %v1438 = vsel %vm1428, %v1435, %v1437
        %v1439 = vsel %vm1427, %v1417, %v1420
        %v1440 = vsel %vm1430, %v1426, 1326507024
        %v1441 = vsel %vm1429, %v1423, %v1440
        %v1442 = vsel %vm1428, %v1439, %v1441
        %v1443 = vshll.u32 %v1403, 8
        %v1444 = vmul.u32.u64.compose %v1443, %v1442
        %v1445 = vextract.low.u32 %v1444
        %v1446 = vextract.high.u32 %v1444
        %v1447 = vmul.u32.u64.compose %v1443, %v1438
        %v1448 = vextract.low.u32 %v1447
        %v1449 = vextract.high.u32 %v1447
        %v1450 = vmul.u32 %v1443, %v1434
        %v1451 = vadd.s32 %v1446, %v1448
        %vm1452 = vc.u32 %v1446, %v1448
        %v1453 = vadd.s32 %v1449, 1
        %v1454 = vsel %vm1452, %v1453, %v1449
        %v1455 = vadd.s32 %v1450, %v1454
        %v1456 = vadd.s32 %v1455, 536870912
        %v1457 = vshrl.u32 %v1456, 30
        %v1458 = vshll.u32 %v1457, 30
        %v1459 = vsub.s32 %v1455, %v1458
        %vm1460 = vcmp.lt.s32.totalorder %v1459, 0
        %v1461 = vsub.s32 0, %v1459
        %v1462 = vsel %vm1460, %v1461, %v1459
        %v1463 = vclz %v1462
        %v1464 = vsub.s32 %v1463, 2
        %vm1465 = vcmp.gt.s32.totalorder 0, %v1464
        %v1466 = vsel %vm1465, 0, %v1464
        %v1467 = vsub.s32 32, %v1466
        %v1468 = vshll.u32 %v1459, %v1466
        %v1469 = vshrl.u32 %v1451, %v1467
        %v1470 = vor.u32 %v1468, %v1469
        %v1471 = vsub.s32 4294967266, %v1466
        %v1472 = vadd.s32 %v1471, 127
        %v1473 = vshll.u32 %v1472, 23
        %v1474 = vor.u32 4788187, %v1473
        %v1475 = vand.u32 2147483647, %v1474
        %v1477 = vcvt.s32.f32 %v1470
        %v1478 = vmul.f32 %v1477, %v1475
        %v1479 = vxor.u32 %v1478, 2147483648
        %v1480 = vsel %vm1397, %v1479, %v1478
        %v1481 = vsub.s32 4, %v1457
        %v1482 = vsel %vm1397, %v1481, %v1457
        %v1483 = vsel %vm1396, %v658, %v1480
        %v1484 = vsel %vm1396, 0, %v1482
        %v1485 = vcosq.f32.pop %v1483
        %v1486 = vsinq.f32.pop %v1483
        %vm1487 = vweird.f32 %v658
        %v1488 = vadd.s32 %v1484, 3
        %v1489 = vand.u32 %v1488, 3
        %vm1490 = vcmp.lt.s32.totalorder %v1489, 2
        %vm1491 = vcmp.eq.s32.totalorder %v1489, 0
        %v1492 = vxor.u32 %v1486, 2147483648
        %v1493 = vsel %vm1491, %v1485, %v1492
        %vm1494 = vcmp.eq.s32.totalorder %v1489, 2
        %v1495 = vxor.u32 %v1485, 2147483648
        %v1496 = vsel %vm1494, %v1495, %v1486
        %v1497 = vsel %vm1490, %v1493, %v1496
        %v1498 = vsel %vm1487, nan, %v1497
        %v1499 = vand.u32 2147483647, %v659
        %vm1500 = vcmp.le.f32.partialorder %v1499, 0.7853982
        %vm1501 = vcmp.lt.s32.totalorder %v659, 0
        %v1502 = vand.u32 %v659, 2139095040
        %v1503 = vshrl.u32 %v1502, 23
        %v1504 = vsub.s32 %v1503, 127
        %v1505 = vand.u32 2147483647, %v659
        %v1506 = vand.u32 %v1505, 8388607
        %v1507 = vor.u32 %v1506, 8388608
        %v1508 = vsub.s32 0, %v1507
        %v1509 = vadd.s32 %v1504, 1
        %vm1510 = vcmp.gt.s32.totalorder %v1509, 0
        %v1511 = vsel %vm1510, %v1509, 0
        %v1512 = vshrl.u32 %v1511, 5
        %v1513 = vand.u32 %v1511, 31
        %v1514 = vsub.s32 32, %v1513
        %v1515 = vshrl.u32 683565275, %v1514
        %v1516 = vshll.u32 683565275, %v1513
        %v1517 = vshrl.u32 2475754826, %v1514
        %v1518 = vor.u32 %v1516, %v1517
        %v1519 = vshll.u32 2475754826, %v1513
        %v1520 = vshrl.u32 2131351028, %v1514
        %v1521 = vor.u32 %v1519, %v1520
        %v1522 = vshll.u32 2131351028, %v1513
        %v1523 = vshrl.u32 2102212464, %v1514
        %v1524 = vor.u32 %v1522, %v1523
        %v1525 = vshll.u32 2102212464, %v1513
        %v1526 = vshrl.u32 920167782, %v1514
        %v1527 = vor.u32 %v1525, %v1526
        %v1528 = vshll.u32 920167782, %v1513
        %v1529 = vshrl.u32 1326507024, %v1514
        %v1530 = vor.u32 %v1528, %v1529
        %vm1531 = vcmp.lt.s32.totalorder %v1512, 1
        %vm1532 = vcmp.lt.s32.totalorder %v1512, 2
        %vm1533 = vcmp.lt.s32.totalorder %v1512, 3
        %vm1534 = vcmp.lt.s32.totalorder %v1512, 4
        %v1535 = vsel %vm1531, %v1515, %v1518
        %v1536 = vsel %vm1534, %v1524, 2102212464
        %v1537 = vsel %vm1533, %v1521, %v1536
        %v1538 = vsel %vm1532, %v1535, %v1537
        %v1539 = vsel %vm1531, %v1518, %v1521
        %v1540 = vsel %vm1534, %v1527, 920167782
        %v1541 = vsel %vm1533, %v1524, %v1540
        %v1542 = vsel %vm1532, %v1539, %v1541
        %v1543 = vsel %vm1531, %v1521, %v1524
        %v1544 = vsel %vm1534, %v1530, 1326507024
        %v1545 = vsel %vm1533, %v1527, %v1544
        %v1546 = vsel %vm1532, %v1543, %v1545
        %v1547 = vshll.u32 %v1507, 8
        %v1548 = vmul.u32.u64.compose %v1547, %v1546
        %v1549 = vextract.low.u32 %v1548
        %v1550 = vextract.high.u32 %v1548
        %v1551 = vmul.u32.u64.compose %v1547, %v1542
        %v1552 = vextract.low.u32 %v1551
        %v1553 = vextract.high.u32 %v1551
        %v1554 = vmul.u32 %v1547, %v1538
        %v1555 = vadd.s32 %v1550, %v1552
        %vm1556 = vc.u32 %v1550, %v1552
        %v1557 = vadd.s32 %v1553, 1
        %v1558 = vsel %vm1556, %v1557, %v1553
        %v1559 = vadd.s32 %v1554, %v1558
        %v1560 = vadd.s32 %v1559, 536870912
        %v1561 = vshrl.u32 %v1560, 30
        %v1562 = vshll.u32 %v1561, 30
        %v1563 = vsub.s32 %v1559, %v1562
        %vm1564 = vcmp.lt.s32.totalorder %v1563, 0
        %v1565 = vsub.s32 0, %v1563
        %v1566 = vsel %vm1564, %v1565, %v1563
        %v1567 = vclz %v1566
        %v1568 = vsub.s32 %v1567, 2
        %vm1569 = vcmp.gt.s32.totalorder 0, %v1568
        %v1570 = vsel %vm1569, 0, %v1568
        %v1571 = vsub.s32 32, %v1570
        %v1572 = vshll.u32 %v1563, %v1570
        %v1573 = vshrl.u32 %v1555, %v1571
        %v1574 = vor.u32 %v1572, %v1573
        %v1575 = vsub.s32 4294967266, %v1570
        %v1576 = vadd.s32 %v1575, 127
        %v1577 = vshll.u32 %v1576, 23
        %v1578 = vor.u32 4788187, %v1577
        %v1579 = vand.u32 2147483647, %v1578
        %v1581 = vcvt.s32.f32 %v1574
        %v1582 = vmul.f32 %v1581, %v1579
        %v1583 = vxor.u32 %v1582, 2147483648
        %v1584 = vsel %vm1501, %v1583, %v1582
        %v1585 = vsub.s32 4, %v1561
        %v1586 = vsel %vm1501, %v1585, %v1561
        %v1587 = vsel %vm1500, %v659, %v1584
        %v1588 = vsel %vm1500, 0, %v1586
        %v1589 = vcosq.f32.pop %v1587
        %v1590 = vsinq.f32.pop %v1587
        %vm1591 = vweird.f32 %v659
        %v1592 = vadd.s32 %v1588, 3
        %v1593 = vand.u32 %v1592, 3
        %vm1594 = vcmp.lt.s32.totalorder %v1593, 2
        %vm1595 = vcmp.eq.s32.totalorder %v1593, 0
        %v1596 = vxor.u32 %v1590, 2147483648
        %v1597 = vsel %vm1595, %v1589, %v1596
        %vm1598 = vcmp.eq.s32.totalorder %v1593, 2
        %v1599 = vxor.u32 %v1589, 2147483648
        %v1600 = vsel %vm1598, %v1599, %v1590
        %v1601 = vsel %vm1594, %v1597, %v1600
        %v1602 = vsel %vm1591, nan, %v1601
        %v1603 = vand.u32 2147483647, %v660
        %vm1604 = vcmp.le.f32.partialorder %v1603, 0.7853982
        %vm1605 = vcmp.lt.s32.totalorder %v660, 0
        %v1606 = vand.u32 %v660, 2139095040
        %v1607 = vshrl.u32 %v1606, 23
        %v1608 = vsub.s32 %v1607, 127
        %v1609 = vand.u32 2147483647, %v660
        %v1610 = vand.u32 %v1609, 8388607
        %v1611 = vor.u32 %v1610, 8388608
        %v1612 = vsub.s32 0, %v1611
        %v1613 = vadd.s32 %v1608, 1
        %vm1614 = vcmp.gt.s32.totalorder %v1613, 0
        %v1615 = vsel %vm1614, %v1613, 0
        %v1616 = vshrl.u32 %v1615, 5
        %v1617 = vand.u32 %v1615, 31
        %v1618 = vsub.s32 32, %v1617
        %v1619 = vshrl.u32 683565275, %v1618
        %v1620 = vshll.u32 683565275, %v1617
        %v1621 = vshrl.u32 2475754826, %v1618
        %v1622 = vor.u32 %v1620, %v1621
        %v1623 = vshll.u32 2475754826, %v1617
        %v1624 = vshrl.u32 2131351028, %v1618
        %v1625 = vor.u32 %v1623, %v1624
        %v1626 = vshll.u32 2131351028, %v1617
        %v1627 = vshrl.u32 2102212464, %v1618
        %v1628 = vor.u32 %v1626, %v1627
        %v1629 = vshll.u32 2102212464, %v1617
        %v1630 = vshrl.u32 920167782, %v1618
        %v1631 = vor.u32 %v1629, %v1630
        %v1632 = vshll.u32 920167782, %v1617
        %v1633 = vshrl.u32 1326507024, %v1618
        %v1634 = vor.u32 %v1632, %v1633
        %vm1635 = vcmp.lt.s32.totalorder %v1616, 1
        %vm1636 = vcmp.lt.s32.totalorder %v1616, 2
        %vm1637 = vcmp.lt.s32.totalorder %v1616, 3
        %vm1638 = vcmp.lt.s32.totalorder %v1616, 4
        %v1639 = vsel %vm1635, %v1619, %v1622
        %v1640 = vsel %vm1638, %v1628, 2102212464
        %v1641 = vsel %vm1637, %v1625, %v1640
        %v1642 = vsel %vm1636, %v1639, %v1641
        %v1643 = vsel %vm1635, %v1622, %v1625
        %v1644 = vsel %vm1638, %v1631, 920167782
        %v1645 = vsel %vm1637, %v1628, %v1644
        %v1646 = vsel %vm1636, %v1643, %v1645
        %v1647 = vsel %vm1635, %v1625, %v1628
        %v1648 = vsel %vm1638, %v1634, 1326507024
        %v1649 = vsel %vm1637, %v1631, %v1648
        %v1650 = vsel %vm1636, %v1647, %v1649
        %v1651 = vshll.u32 %v1611, 8
        %v1652 = vmul.u32.u64.compose %v1651, %v1650
        %v1653 = vextract.low.u32 %v1652
        %v1654 = vextract.high.u32 %v1652
        %v1655 = vmul.u32.u64.compose %v1651, %v1646
        %v1656 = vextract.low.u32 %v1655
        %v1657 = vextract.high.u32 %v1655
        %v1658 = vmul.u32 %v1651, %v1642
        %v1659 = vadd.s32 %v1654, %v1656
        %vm1660 = vc.u32 %v1654, %v1656
        %v1661 = vadd.s32 %v1657, 1
        %v1662 = vsel %vm1660, %v1661, %v1657
        %v1663 = vadd.s32 %v1658, %v1662
        %v1664 = vadd.s32 %v1663, 536870912
        %v1665 = vshrl.u32 %v1664, 30
        %v1666 = vshll.u32 %v1665, 30
        %v1667 = vsub.s32 %v1663, %v1666
        %vm1668 = vcmp.lt.s32.totalorder %v1667, 0
        %v1669 = vsub.s32 0, %v1667
        %v1670 = vsel %vm1668, %v1669, %v1667
        %v1671 = vclz %v1670
        %v1672 = vsub.s32 %v1671, 2
        %vm1673 = vcmp.gt.s32.totalorder 0, %v1672
        %v1674 = vsel %vm1673, 0, %v1672
        %v1675 = vsub.s32 32, %v1674
        %v1676 = vshll.u32 %v1667, %v1674
        %v1677 = vshrl.u32 %v1659, %v1675
        %v1678 = vor.u32 %v1676, %v1677
        %v1679 = vsub.s32 4294967266, %v1674
        %v1680 = vadd.s32 %v1679, 127
        %v1681 = vshll.u32 %v1680, 23
        %v1682 = vor.u32 4788187, %v1681
        %v1683 = vand.u32 2147483647, %v1682
        %v1685 = vcvt.s32.f32 %v1678
        %v1686 = vmul.f32 %v1685, %v1683
        %v1687 = vxor.u32 %v1686, 2147483648
        %v1688 = vsel %vm1605, %v1687, %v1686
        %v1689 = vsub.s32 4, %v1665
        %v1690 = vsel %vm1605, %v1689, %v1665
        %v1691 = vsel %vm1604, %v660, %v1688
        %v1692 = vsel %vm1604, 0, %v1690
        %v1693 = vcosq.f32.pop %v1691
        %v1694 = vsinq.f32.pop %v1691
        %vm1695 = vweird.f32 %v660
        %v1696 = vadd.s32 %v1692, 3
        %v1697 = vand.u32 %v1696, 3
        %vm1698 = vcmp.lt.s32.totalorder %v1697, 2
        %vm1699 = vcmp.eq.s32.totalorder %v1697, 0
        %v1700 = vxor.u32 %v1694, 2147483648
        %v1701 = vsel %vm1699, %v1693, %v1700
        %vm1702 = vcmp.eq.s32.totalorder %v1697, 2
        %v1703 = vxor.u32 %v1693, 2147483648
        %v1704 = vsel %vm1702, %v1703, %v1694
        %v1705 = vsel %vm1698, %v1701, %v1704
        %v1706 = vsel %vm1695, nan, %v1705
        %v1707 = vand.u32 2147483647, %v661
        %vm1708 = vcmp.le.f32.partialorder %v1707, 0.7853982
        %vm1709 = vcmp.lt.s32.totalorder %v661, 0
        %v1710 = vand.u32 %v661, 2139095040
        %v1711 = vshrl.u32 %v1710, 23
        %v1712 = vsub.s32 %v1711, 127
        %v1713 = vand.u32 2147483647, %v661
        %v1714 = vand.u32 %v1713, 8388607
        %v1715 = vor.u32 %v1714, 8388608
        %v1716 = vsub.s32 0, %v1715
        %v1717 = vadd.s32 %v1712, 1
        %vm1718 = vcmp.gt.s32.totalorder %v1717, 0
        %v1719 = vsel %vm1718, %v1717, 0
        %v1720 = vshrl.u32 %v1719, 5
        %v1721 = vand.u32 %v1719, 31
        %v1722 = vsub.s32 32, %v1721
        %v1723 = vshrl.u32 683565275, %v1722
        %v1724 = vshll.u32 683565275, %v1721
        %v1725 = vshrl.u32 2475754826, %v1722
        %v1726 = vor.u32 %v1724, %v1725
        %v1727 = vshll.u32 2475754826, %v1721
        %v1728 = vshrl.u32 2131351028, %v1722
        %v1729 = vor.u32 %v1727, %v1728
        %v1730 = vshll.u32 2131351028, %v1721
        %v1731 = vshrl.u32 2102212464, %v1722
        %v1732 = vor.u32 %v1730, %v1731
        %v1733 = vshll.u32 2102212464, %v1721
        %v1734 = vshrl.u32 920167782, %v1722
        %v1735 = vor.u32 %v1733, %v1734
        %v1736 = vshll.u32 920167782, %v1721
        %v1737 = vshrl.u32 1326507024, %v1722
        %v1738 = vor.u32 %v1736, %v1737
        %vm1739 = vcmp.lt.s32.totalorder %v1720, 1
        %vm1740 = vcmp.lt.s32.totalorder %v1720, 2
        %vm1741 = vcmp.lt.s32.totalorder %v1720, 3
        %vm1742 = vcmp.lt.s32.totalorder %v1720, 4
        %v1743 = vsel %vm1739, %v1723, %v1726
        %v1744 = vsel %vm1742, %v1732, 2102212464
        %v1745 = vsel %vm1741, %v1729, %v1744
        %v1746 = vsel %vm1740, %v1743, %v1745
        %v1747 = vsel %vm1739, %v1726, %v1729
        %v1748 = vsel %vm1742, %v1735, 920167782
        %v1749 = vsel %vm1741, %v1732, %v1748
        %v1750 = vsel %vm1740, %v1747, %v1749
        %v1751 = vsel %vm1739, %v1729, %v1732
        %v1752 = vsel %vm1742, %v1738, 1326507024
        %v1753 = vsel %vm1741, %v1735, %v1752
        %v1754 = vsel %vm1740, %v1751, %v1753
        %v1755 = vshll.u32 %v1715, 8
        %v1756 = vmul.u32.u64.compose %v1755, %v1754
        %v1757 = vextract.low.u32 %v1756
        %v1758 = vextract.high.u32 %v1756
        %v1759 = vmul.u32.u64.compose %v1755, %v1750
        %v1760 = vextract.low.u32 %v1759
        %v1761 = vextract.high.u32 %v1759
        %v1762 = vmul.u32 %v1755, %v1746
        %v1763 = vadd.s32 %v1758, %v1760
        %vm1764 = vc.u32 %v1758, %v1760
        %v1765 = vadd.s32 %v1761, 1
        %v1766 = vsel %vm1764, %v1765, %v1761
        %v1767 = vadd.s32 %v1762, %v1766
        %v1768 = vadd.s32 %v1767, 536870912
        %v1769 = vshrl.u32 %v1768, 30
        %v1770 = vshll.u32 %v1769, 30
        %v1771 = vsub.s32 %v1767, %v1770
        %vm1772 = vcmp.lt.s32.totalorder %v1771, 0
        %v1773 = vsub.s32 0, %v1771
        %v1774 = vsel %vm1772, %v1773, %v1771
        %v1775 = vclz %v1774
        %v1776 = vsub.s32 %v1775, 2
        %vm1777 = vcmp.gt.s32.totalorder 0, %v1776
        %v1778 = vsel %vm1777, 0, %v1776
        %v1779 = vsub.s32 32, %v1778
        %v1780 = vshll.u32 %v1771, %v1778
        %v1781 = vshrl.u32 %v1763, %v1779
        %v1782 = vor.u32 %v1780, %v1781
        %v1783 = vsub.s32 4294967266, %v1778
        %v1784 = vadd.s32 %v1783, 127
        %v1785 = vshll.u32 %v1784, 23
        %v1786 = vor.u32 4788187, %v1785
        %v1787 = vand.u32 2147483647, %v1786
        %v1789 = vcvt.s32.f32 %v1782
        %v1790 = vmul.f32 %v1789, %v1787
        %v1791 = vxor.u32 %v1790, 2147483648
        %v1792 = vsel %vm1709, %v1791, %v1790
        %v1793 = vsub.s32 4, %v1769
        %v1794 = vsel %vm1709, %v1793, %v1769
        %v1795 = vsel %vm1708, %v661, %v1792
        %v1796 = vsel %vm1708, 0, %v1794
        %v1797 = vcosq.f32.pop %v1795
        %v1798 = vsinq.f32.pop %v1795
        %vm1799 = vweird.f32 %v661
        %v1800 = vadd.s32 %v1796, 3
        %v1801 = vand.u32 %v1800, 3
        %vm1802 = vcmp.lt.s32.totalorder %v1801, 2
        %vm1803 = vcmp.eq.s32.totalorder %v1801, 0
        %v1804 = vxor.u32 %v1798, 2147483648
        %v1805 = vsel %vm1803, %v1797, %v1804
        %vm1806 = vcmp.eq.s32.totalorder %v1801, 2
        %v1807 = vxor.u32 %v1797, 2147483648
        %v1808 = vsel %vm1806, %v1807, %v1798
        %v1809 = vsel %vm1802, %v1805, %v1808
        %v1810 = vsel %vm1799, nan, %v1809
        %v1811 = vand.u32 2147483647, %v662
        %vm1812 = vcmp.le.f32.partialorder %v1811, 0.7853982
        %vm1813 = vcmp.lt.s32.totalorder %v662, 0
        %v1814 = vand.u32 %v662, 2139095040
        %v1815 = vshrl.u32 %v1814, 23
        %v1816 = vsub.s32 %v1815, 127
        %v1817 = vand.u32 2147483647, %v662
        %v1818 = vand.u32 %v1817, 8388607
        %v1819 = vor.u32 %v1818, 8388608
        %v1820 = vsub.s32 0, %v1819
        %v1821 = vadd.s32 %v1816, 1
        %vm1822 = vcmp.gt.s32.totalorder %v1821, 0
        %v1823 = vsel %vm1822, %v1821, 0
        %v1824 = vshrl.u32 %v1823, 5
        %v1825 = vand.u32 %v1823, 31
        %v1826 = vsub.s32 32, %v1825
        %v1827 = vshrl.u32 683565275, %v1826
        %v1828 = vshll.u32 683565275, %v1825
        %v1829 = vshrl.u32 2475754826, %v1826
        %v1830 = vor.u32 %v1828, %v1829
        %v1831 = vshll.u32 2475754826, %v1825
        %v1832 = vshrl.u32 2131351028, %v1826
        %v1833 = vor.u32 %v1831, %v1832
        %v1834 = vshll.u32 2131351028, %v1825
        %v1835 = vshrl.u32 2102212464, %v1826
        %v1836 = vor.u32 %v1834, %v1835
        %v1837 = vshll.u32 2102212464, %v1825
        %v1838 = vshrl.u32 920167782, %v1826
        %v1839 = vor.u32 %v1837, %v1838
        %v1840 = vshll.u32 920167782, %v1825
        %v1841 = vshrl.u32 1326507024, %v1826
        %v1842 = vor.u32 %v1840, %v1841
        %vm1843 = vcmp.lt.s32.totalorder %v1824, 1
        %vm1844 = vcmp.lt.s32.totalorder %v1824, 2
        %vm1845 = vcmp.lt.s32.totalorder %v1824, 3
        %vm1846 = vcmp.lt.s32.totalorder %v1824, 4
        %v1847 = vsel %vm1843, %v1827, %v1830
        %v1848 = vsel %vm1846, %v1836, 2102212464
        %v1849 = vsel %vm1845, %v1833, %v1848
        %v1850 = vsel %vm1844, %v1847, %v1849
        %v1851 = vsel %vm1843, %v1830, %v1833
        %v1852 = vsel %vm1846, %v1839, 920167782
        %v1853 = vsel %vm1845, %v1836, %v1852
        %v1854 = vsel %vm1844, %v1851, %v1853
        %v1855 = vsel %vm1843, %v1833, %v1836
        %v1856 = vsel %vm1846, %v1842, 1326507024
        %v1857 = vsel %vm1845, %v1839, %v1856
        %v1858 = vsel %vm1844, %v1855, %v1857
        %v1859 = vshll.u32 %v1819, 8
        %v1860 = vmul.u32.u64.compose %v1859, %v1858
        %v1861 = vextract.low.u32 %v1860
        %v1862 = vextract.high.u32 %v1860
        %v1863 = vmul.u32.u64.compose %v1859, %v1854
        %v1864 = vextract.low.u32 %v1863
        %v1865 = vextract.high.u32 %v1863
        %v1866 = vmul.u32 %v1859, %v1850
        %v1867 = vadd.s32 %v1862, %v1864
        %vm1868 = vc.u32 %v1862, %v1864
        %v1869 = vadd.s32 %v1865, 1
        %v1870 = vsel %vm1868, %v1869, %v1865
        %v1871 = vadd.s32 %v1866, %v1870
        %v1872 = vadd.s32 %v1871, 536870912
        %v1873 = vshrl.u32 %v1872, 30
        %v1874 = vshll.u32 %v1873, 30
        %v1875 = vsub.s32 %v1871, %v1874
        %vm1876 = vcmp.lt.s32.totalorder %v1875, 0
        %v1877 = vsub.s32 0, %v1875
        %v1878 = vsel %vm1876, %v1877, %v1875
        %v1879 = vclz %v1878
        %v1880 = vsub.s32 %v1879, 2
        %vm1881 = vcmp.gt.s32.totalorder 0, %v1880
        %v1882 = vsel %vm1881, 0, %v1880
        %v1883 = vsub.s32 32, %v1882
        %v1884 = vshll.u32 %v1875, %v1882
        %v1885 = vshrl.u32 %v1867, %v1883
        %v1886 = vor.u32 %v1884, %v1885
        %v1887 = vsub.s32 4294967266, %v1882
        %v1888 = vadd.s32 %v1887, 127
        %v1889 = vshll.u32 %v1888, 23
        %v1890 = vor.u32 4788187, %v1889
        %v1891 = vand.u32 2147483647, %v1890
        %v1893 = vcvt.s32.f32 %v1886
        %v1894 = vmul.f32 %v1893, %v1891
        %v1895 = vxor.u32 %v1894, 2147483648
        %v1896 = vsel %vm1813, %v1895, %v1894
        %v1897 = vsub.s32 4, %v1873
        %v1898 = vsel %vm1813, %v1897, %v1873
        %v1899 = vsel %vm1812, %v662, %v1896
        %v1900 = vsel %vm1812, 0, %v1898
        %v1901 = vcosq.f32.pop %v1899
        %v1902 = vsinq.f32.pop %v1899
        %vm1903 = vweird.f32 %v662
        %v1904 = vadd.s32 %v1900, 3
        %v1905 = vand.u32 %v1904, 3
        %vm1906 = vcmp.lt.s32.totalorder %v1905, 2
        %vm1907 = vcmp.eq.s32.totalorder %v1905, 0
        %v1908 = vxor.u32 %v1902, 2147483648
        %v1909 = vsel %vm1907, %v1901, %v1908
        %vm1910 = vcmp.eq.s32.totalorder %v1905, 2
        %v1911 = vxor.u32 %v1901, 2147483648
        %v1912 = vsel %vm1910, %v1911, %v1902
        %v1913 = vsel %vm1906, %v1909, %v1912
        %v1914 = vsel %vm1903, nan, %v1913
        %v1915 = vand.u32 2147483647, %v663
        %vm1916 = vcmp.le.f32.partialorder %v1915, 0.7853982
        %vm1917 = vcmp.lt.s32.totalorder %v663, 0
        %v1918 = vand.u32 %v663, 2139095040
        %v1919 = vshrl.u32 %v1918, 23
        %v1920 = vsub.s32 %v1919, 127
        %v1921 = vand.u32 2147483647, %v663
        %v1922 = vand.u32 %v1921, 8388607
        %v1923 = vor.u32 %v1922, 8388608
        %v1924 = vsub.s32 0, %v1923
        %v1925 = vadd.s32 %v1920, 1
        %vm1926 = vcmp.gt.s32.totalorder %v1925, 0
        %v1927 = vsel %vm1926, %v1925, 0
        %v1928 = vshrl.u32 %v1927, 5
        %v1929 = vand.u32 %v1927, 31
        %v1930 = vsub.s32 32, %v1929
        %v1931 = vshrl.u32 683565275, %v1930
        %v1932 = vshll.u32 683565275, %v1929
        %v1933 = vshrl.u32 2475754826, %v1930
        %v1934 = vor.u32 %v1932, %v1933
        %v1935 = vshll.u32 2475754826, %v1929
        %v1936 = vshrl.u32 2131351028, %v1930
        %v1937 = vor.u32 %v1935, %v1936
        %v1938 = vshll.u32 2131351028, %v1929
        %v1939 = vshrl.u32 2102212464, %v1930
        %v1940 = vor.u32 %v1938, %v1939
        %v1941 = vshll.u32 2102212464, %v1929
        %v1942 = vshrl.u32 920167782, %v1930
        %v1943 = vor.u32 %v1941, %v1942
        %v1944 = vshll.u32 920167782, %v1929
        %v1945 = vshrl.u32 1326507024, %v1930
        %v1946 = vor.u32 %v1944, %v1945
        %vm1947 = vcmp.lt.s32.totalorder %v1928, 1
        %vm1948 = vcmp.lt.s32.totalorder %v1928, 2
        %vm1949 = vcmp.lt.s32.totalorder %v1928, 3
        %vm1950 = vcmp.lt.s32.totalorder %v1928, 4
        %v1951 = vsel %vm1947, %v1931, %v1934
        %v1952 = vsel %vm1950, %v1940, 2102212464
        %v1953 = vsel %vm1949, %v1937, %v1952
        %v1954 = vsel %vm1948, %v1951, %v1953
        %v1955 = vsel %vm1947, %v1934, %v1937
        %v1956 = vsel %vm1950, %v1943, 920167782
        %v1957 = vsel %vm1949, %v1940, %v1956
        %v1958 = vsel %vm1948, %v1955, %v1957
        %v1959 = vsel %vm1947, %v1937, %v1940
        %v1960 = vsel %vm1950, %v1946, 1326507024
        %v1961 = vsel %vm1949, %v1943, %v1960
        %v1962 = vsel %vm1948, %v1959, %v1961
        %v1963 = vshll.u32 %v1923, 8
        %v1964 = vmul.u32.u64.compose %v1963, %v1962
        %v1965 = vextract.low.u32 %v1964
        %v1966 = vextract.high.u32 %v1964
        %v1967 = vmul.u32.u64.compose %v1963, %v1958
        %v1968 = vextract.low.u32 %v1967
        %v1969 = vextract.high.u32 %v1967
        %v1970 = vmul.u32 %v1963, %v1954
        %v1971 = vadd.s32 %v1966, %v1968
        %vm1972 = vc.u32 %v1966, %v1968
        %v1973 = vadd.s32 %v1969, 1
        %v1974 = vsel %vm1972, %v1973, %v1969
        %v1975 = vadd.s32 %v1970, %v1974
        %v1976 = vadd.s32 %v1975, 536870912
        %v1977 = vshrl.u32 %v1976, 30
        %v1978 = vshll.u32 %v1977, 30
        %v1979 = vsub.s32 %v1975, %v1978
        %vm1980 = vcmp.lt.s32.totalorder %v1979, 0
        %v1981 = vsub.s32 0, %v1979
        %v1982 = vsel %vm1980, %v1981, %v1979
        %v1983 = vclz %v1982
        %v1984 = vsub.s32 %v1983, 2
        %vm1985 = vcmp.gt.s32.totalorder 0, %v1984
        %v1986 = vsel %vm1985, 0, %v1984
        %v1987 = vsub.s32 32, %v1986
        %v1988 = vshll.u32 %v1979, %v1986
        %v1989 = vshrl.u32 %v1971, %v1987
        %v1990 = vor.u32 %v1988, %v1989
        %v1991 = vsub.s32 4294967266, %v1986
        %v1992 = vadd.s32 %v1991, 127
        %v1993 = vshll.u32 %v1992, 23
        %v1994 = vor.u32 4788187, %v1993
        %v1995 = vand.u32 2147483647, %v1994
        %v1997 = vcvt.s32.f32 %v1990
        %v1998 = vmul.f32 %v1997, %v1995
        %v1999 = vxor.u32 %v1998, 2147483648
        %v2000 = vsel %vm1917, %v1999, %v1998
        %v2001 = vsub.s32 4, %v1977
        %v2002 = vsel %vm1917, %v2001, %v1977
        %v2003 = vsel %vm1916, %v663, %v2000
        %v2004 = vsel %vm1916, 0, %v2002
        %v2005 = vcosq.f32.pop %v2003
        %v2006 = vsinq.f32.pop %v2003
        %vm2007 = vweird.f32 %v663
        %v2008 = vadd.s32 %v2004, 3
        %v2009 = vand.u32 %v2008, 3
        %vm2010 = vcmp.lt.s32.totalorder %v2009, 2
        %vm2011 = vcmp.eq.s32.totalorder %v2009, 0
        %v2012 = vxor.u32 %v2006, 2147483648
        %v2013 = vsel %vm2011, %v2005, %v2012
        %vm2014 = vcmp.eq.s32.totalorder %v2009, 2
        %v2015 = vxor.u32 %v2005, 2147483648
        %v2016 = vsel %vm2014, %v2015, %v2006
        %v2017 = vsel %vm2010, %v2013, %v2016
        %v2018 = vsel %vm2007, nan, %v2017
        %v2019 = vand.u32 2147483647, %v664
        %vm2020 = vcmp.le.f32.partialorder %v2019, 0.7853982
        %vm2021 = vcmp.lt.s32.totalorder %v664, 0
        %v2022 = vand.u32 %v664, 2139095040
        %v2023 = vshrl.u32 %v2022, 23
        %v2024 = vsub.s32 %v2023, 127
        %v2025 = vand.u32 2147483647, %v664
        %v2026 = vand.u32 %v2025, 8388607
        %v2027 = vor.u32 %v2026, 8388608
        %v2028 = vsub.s32 0, %v2027
        %v2029 = vadd.s32 %v2024, 1
        %vm2030 = vcmp.gt.s32.totalorder %v2029, 0
        %v2031 = vsel %vm2030, %v2029, 0
        %v2032 = vshrl.u32 %v2031, 5
        %v2033 = vand.u32 %v2031, 31
        %v2034 = vsub.s32 32, %v2033
        %v2035 = vshrl.u32 683565275, %v2034
        %v2036 = vshll.u32 683565275, %v2033
        %v2037 = vshrl.u32 2475754826, %v2034
        %v2038 = vor.u32 %v2036, %v2037
        %v2039 = vshll.u32 2475754826, %v2033
        %v2040 = vshrl.u32 2131351028, %v2034
        %v2041 = vor.u32 %v2039, %v2040
        %v2042 = vshll.u32 2131351028, %v2033
        %v2043 = vshrl.u32 2102212464, %v2034
        %v2044 = vor.u32 %v2042, %v2043
        %v2045 = vshll.u32 2102212464, %v2033
        %v2046 = vshrl.u32 920167782, %v2034
        %v2047 = vor.u32 %v2045, %v2046
        %v2048 = vshll.u32 920167782, %v2033
        %v2049 = vshrl.u32 1326507024, %v2034
        %v2050 = vor.u32 %v2048, %v2049
        %vm2051 = vcmp.lt.s32.totalorder %v2032, 1
        %vm2052 = vcmp.lt.s32.totalorder %v2032, 2
        %vm2053 = vcmp.lt.s32.totalorder %v2032, 3
        %vm2054 = vcmp.lt.s32.totalorder %v2032, 4
        %v2055 = vsel %vm2051, %v2035, %v2038
        %v2056 = vsel %vm2054, %v2044, 2102212464
        %v2057 = vsel %vm2053, %v2041, %v2056
        %v2058 = vsel %vm2052, %v2055, %v2057
        %v2059 = vsel %vm2051, %v2038, %v2041
        %v2060 = vsel %vm2054, %v2047, 920167782
        %v2061 = vsel %vm2053, %v2044, %v2060
        %v2062 = vsel %vm2052, %v2059, %v2061
        %v2063 = vsel %vm2051, %v2041, %v2044
        %v2064 = vsel %vm2054, %v2050, 1326507024
        %v2065 = vsel %vm2053, %v2047, %v2064
        %v2066 = vsel %vm2052, %v2063, %v2065
        %v2067 = vshll.u32 %v2027, 8
        %v2068 = vmul.u32.u64.compose %v2067, %v2066
        %v2069 = vextract.low.u32 %v2068
        %v2070 = vextract.high.u32 %v2068
        %v2071 = vmul.u32.u64.compose %v2067, %v2062
        %v2072 = vextract.low.u32 %v2071
        %v2073 = vextract.high.u32 %v2071
        %v2074 = vmul.u32 %v2067, %v2058
        %v2075 = vadd.s32 %v2070, %v2072
        %vm2076 = vc.u32 %v2070, %v2072
        %v2077 = vadd.s32 %v2073, 1
        %v2078 = vsel %vm2076, %v2077, %v2073
        %v2079 = vadd.s32 %v2074, %v2078
        %v2080 = vadd.s32 %v2079, 536870912
        %v2081 = vshrl.u32 %v2080, 30
        %v2082 = vshll.u32 %v2081, 30
        %v2083 = vsub.s32 %v2079, %v2082
        %vm2084 = vcmp.lt.s32.totalorder %v2083, 0
        %v2085 = vsub.s32 0, %v2083
        %v2086 = vsel %vm2084, %v2085, %v2083
        %v2087 = vclz %v2086
        %v2088 = vsub.s32 %v2087, 2
        %vm2089 = vcmp.gt.s32.totalorder 0, %v2088
        %v2090 = vsel %vm2089, 0, %v2088
        %v2091 = vsub.s32 32, %v2090
        %v2092 = vshll.u32 %v2083, %v2090
        %v2093 = vshrl.u32 %v2075, %v2091
        %v2094 = vor.u32 %v2092, %v2093
        %v2095 = vsub.s32 4294967266, %v2090
        %v2096 = vadd.s32 %v2095, 127
        %v2097 = vshll.u32 %v2096, 23
        %v2098 = vor.u32 4788187, %v2097
        %v2099 = vand.u32 2147483647, %v2098
        %v2101 = vcvt.s32.f32 %v2094
        %v2102 = vmul.f32 %v2101, %v2099
        %v2103 = vxor.u32 %v2102, 2147483648
        %v2104 = vsel %vm2021, %v2103, %v2102
        %v2105 = vsub.s32 4, %v2081
        %v2106 = vsel %vm2021, %v2105, %v2081
        %v2107 = vsel %vm2020, %v664, %v2104
        %v2108 = vsel %vm2020, 0, %v2106
        %v2109 = vcosq.f32.pop %v2107
        %v2110 = vsinq.f32.pop %v2107
        %vm2111 = vweird.f32 %v664
        %v2112 = vadd.s32 %v2108, 3
        %v2113 = vand.u32 %v2112, 3
        %vm2114 = vcmp.lt.s32.totalorder %v2113, 2
        %vm2115 = vcmp.eq.s32.totalorder %v2113, 0
        %v2116 = vxor.u32 %v2110, 2147483648
        %v2117 = vsel %vm2115, %v2109, %v2116
        %vm2118 = vcmp.eq.s32.totalorder %v2113, 2
        %v2119 = vxor.u32 %v2109, 2147483648
        %v2120 = vsel %vm2118, %v2119, %v2110
        %v2121 = vsel %vm2114, %v2117, %v2120
        %v2122 = vsel %vm2111, nan, %v2121
        %v2123 = vand.u32 2147483647, %v665
        %vm2124 = vcmp.le.f32.partialorder %v2123, 0.7853982
        %vm2125 = vcmp.lt.s32.totalorder %v665, 0
        %v2126 = vand.u32 %v665, 2139095040
        %v2127 = vshrl.u32 %v2126, 23
        %v2128 = vsub.s32 %v2127, 127
        %v2129 = vand.u32 2147483647, %v665
        %v2130 = vand.u32 %v2129, 8388607
        %v2131 = vor.u32 %v2130, 8388608
        %v2132 = vsub.s32 0, %v2131
        %v2133 = vadd.s32 %v2128, 1
        %vm2134 = vcmp.gt.s32.totalorder %v2133, 0
        %v2135 = vsel %vm2134, %v2133, 0
        %v2136 = vshrl.u32 %v2135, 5
        %v2137 = vand.u32 %v2135, 31
        %v2138 = vsub.s32 32, %v2137
        %v2139 = vshrl.u32 683565275, %v2138
        %v2140 = vshll.u32 683565275, %v2137
        %v2141 = vshrl.u32 2475754826, %v2138
        %v2142 = vor.u32 %v2140, %v2141
        %v2143 = vshll.u32 2475754826, %v2137
        %v2144 = vshrl.u32 2131351028, %v2138
        %v2145 = vor.u32 %v2143, %v2144
        %v2146 = vshll.u32 2131351028, %v2137
        %v2147 = vshrl.u32 2102212464, %v2138
        %v2148 = vor.u32 %v2146, %v2147
        %v2149 = vshll.u32 2102212464, %v2137
        %v2150 = vshrl.u32 920167782, %v2138
        %v2151 = vor.u32 %v2149, %v2150
        %v2152 = vshll.u32 920167782, %v2137
        %v2153 = vshrl.u32 1326507024, %v2138
        %v2154 = vor.u32 %v2152, %v2153
        %vm2155 = vcmp.lt.s32.totalorder %v2136, 1
        %vm2156 = vcmp.lt.s32.totalorder %v2136, 2
        %vm2157 = vcmp.lt.s32.totalorder %v2136, 3
        %vm2158 = vcmp.lt.s32.totalorder %v2136, 4
        %v2159 = vsel %vm2155, %v2139, %v2142
        %v2160 = vsel %vm2158, %v2148, 2102212464
        %v2161 = vsel %vm2157, %v2145, %v2160
        %v2162 = vsel %vm2156, %v2159, %v2161
        %v2163 = vsel %vm2155, %v2142, %v2145
        %v2164 = vsel %vm2158, %v2151, 920167782
        %v2165 = vsel %vm2157, %v2148, %v2164
        %v2166 = vsel %vm2156, %v2163, %v2165
        %v2167 = vsel %vm2155, %v2145, %v2148
        %v2168 = vsel %vm2158, %v2154, 1326507024
        %v2169 = vsel %vm2157, %v2151, %v2168
        %v2170 = vsel %vm2156, %v2167, %v2169
        %v2171 = vshll.u32 %v2131, 8
        %v2172 = vmul.u32.u64.compose %v2171, %v2170
        %v2173 = vextract.low.u32 %v2172
        %v2174 = vextract.high.u32 %v2172
        %v2175 = vmul.u32.u64.compose %v2171, %v2166
        %v2176 = vextract.low.u32 %v2175
        %v2177 = vextract.high.u32 %v2175
        %v2178 = vmul.u32 %v2171, %v2162
        %v2179 = vadd.s32 %v2174, %v2176
        %vm2180 = vc.u32 %v2174, %v2176
        %v2181 = vadd.s32 %v2177, 1
        %v2182 = vsel %vm2180, %v2181, %v2177
        %v2183 = vadd.s32 %v2178, %v2182
        %v2184 = vadd.s32 %v2183, 536870912
        %v2185 = vshrl.u32 %v2184, 30
        %v2186 = vshll.u32 %v2185, 30
        %v2187 = vsub.s32 %v2183, %v2186
        %vm2188 = vcmp.lt.s32.totalorder %v2187, 0
        %v2189 = vsub.s32 0, %v2187
        %v2190 = vsel %vm2188, %v2189, %v2187
        %v2191 = vclz %v2190
        %v2192 = vsub.s32 %v2191, 2
        %vm2193 = vcmp.gt.s32.totalorder 0, %v2192
        %v2194 = vsel %vm2193, 0, %v2192
        %v2195 = vsub.s32 32, %v2194
        %v2196 = vshll.u32 %v2187, %v2194
        %v2197 = vshrl.u32 %v2179, %v2195
        %v2198 = vor.u32 %v2196, %v2197
        %v2199 = vsub.s32 4294967266, %v2194
        %v2200 = vadd.s32 %v2199, 127
        %v2201 = vshll.u32 %v2200, 23
        %v2202 = vor.u32 4788187, %v2201
        %v2203 = vand.u32 2147483647, %v2202
        %v2205 = vcvt.s32.f32 %v2198
        %v2206 = vmul.f32 %v2205, %v2203
        %v2207 = vxor.u32 %v2206, 2147483648
        %v2208 = vsel %vm2125, %v2207, %v2206
        %v2209 = vsub.s32 4, %v2185
        %v2210 = vsel %vm2125, %v2209, %v2185
        %v2211 = vsel %vm2124, %v665, %v2208
        %v2212 = vsel %vm2124, 0, %v2210
        %v2213 = vcosq.f32.pop %v2211
        %v2214 = vsinq.f32.pop %v2211
        %vm2215 = vweird.f32 %v665
        %v2216 = vadd.s32 %v2212, 3
        %v2217 = vand.u32 %v2216, 3
        %vm2218 = vcmp.lt.s32.totalorder %v2217, 2
        %vm2219 = vcmp.eq.s32.totalorder %v2217, 0
        %v2220 = vxor.u32 %v2214, 2147483648
        %v2221 = vsel %vm2219, %v2213, %v2220
        %vm2222 = vcmp.eq.s32.totalorder %v2217, 2
        %v2223 = vxor.u32 %v2213, 2147483648
        %v2224 = vsel %vm2222, %v2223, %v2214
        %v2225 = vsel %vm2218, %v2221, %v2224
        %v2226 = vsel %vm2215, nan, %v2225
        %v2227 = vand.u32 2147483647, %v666
        %vm2228 = vcmp.le.f32.partialorder %v2227, 0.7853982
        %vm2229 = vcmp.lt.s32.totalorder %v666, 0
        %v2230 = vand.u32 %v666, 2139095040
        %v2231 = vshrl.u32 %v2230, 23
        %v2232 = vsub.s32 %v2231, 127
        %v2233 = vand.u32 2147483647, %v666
        %v2234 = vand.u32 %v2233, 8388607
        %v2235 = vor.u32 %v2234, 8388608
        %v2236 = vsub.s32 0, %v2235
        %v2237 = vadd.s32 %v2232, 1
        %vm2238 = vcmp.gt.s32.totalorder %v2237, 0
        %v2239 = vsel %vm2238, %v2237, 0
        %v2240 = vshrl.u32 %v2239, 5
        %v2241 = vand.u32 %v2239, 31
        %v2242 = vsub.s32 32, %v2241
        %v2243 = vshrl.u32 683565275, %v2242
        %v2244 = vshll.u32 683565275, %v2241
        %v2245 = vshrl.u32 2475754826, %v2242
        %v2246 = vor.u32 %v2244, %v2245
        %v2247 = vshll.u32 2475754826, %v2241
        %v2248 = vshrl.u32 2131351028, %v2242
        %v2249 = vor.u32 %v2247, %v2248
        %v2250 = vshll.u32 2131351028, %v2241
        %v2251 = vshrl.u32 2102212464, %v2242
        %v2252 = vor.u32 %v2250, %v2251
        %v2253 = vshll.u32 2102212464, %v2241
        %v2254 = vshrl.u32 920167782, %v2242
        %v2255 = vor.u32 %v2253, %v2254
        %v2256 = vshll.u32 920167782, %v2241
        %v2257 = vshrl.u32 1326507024, %v2242
        %v2258 = vor.u32 %v2256, %v2257
        %vm2259 = vcmp.lt.s32.totalorder %v2240, 1
        %vm2260 = vcmp.lt.s32.totalorder %v2240, 2
        %vm2261 = vcmp.lt.s32.totalorder %v2240, 3
        %vm2262 = vcmp.lt.s32.totalorder %v2240, 4
        %v2263 = vsel %vm2259, %v2243, %v2246
        %v2264 = vsel %vm2262, %v2252, 2102212464
        %v2265 = vsel %vm2261, %v2249, %v2264
        %v2266 = vsel %vm2260, %v2263, %v2265
        %v2267 = vsel %vm2259, %v2246, %v2249
        %v2268 = vsel %vm2262, %v2255, 920167782
        %v2269 = vsel %vm2261, %v2252, %v2268
        %v2270 = vsel %vm2260, %v2267, %v2269
        %v2271 = vsel %vm2259, %v2249, %v2252
        %v2272 = vsel %vm2262, %v2258, 1326507024
        %v2273 = vsel %vm2261, %v2255, %v2272
        %v2274 = vsel %vm2260, %v2271, %v2273
        %v2275 = vshll.u32 %v2235, 8
        %v2276 = vmul.u32.u64.compose %v2275, %v2274
        %v2277 = vextract.low.u32 %v2276
        %v2278 = vextract.high.u32 %v2276
        %v2279 = vmul.u32.u64.compose %v2275, %v2270
        %v2280 = vextract.low.u32 %v2279
        %v2281 = vextract.high.u32 %v2279
        %v2282 = vmul.u32 %v2275, %v2266
        %v2283 = vadd.s32 %v2278, %v2280
        %vm2284 = vc.u32 %v2278, %v2280
        %v2285 = vadd.s32 %v2281, 1
        %v2286 = vsel %vm2284, %v2285, %v2281
        %v2287 = vadd.s32 %v2282, %v2286
        %v2288 = vadd.s32 %v2287, 536870912
        %v2289 = vshrl.u32 %v2288, 30
        %v2290 = vshll.u32 %v2289, 30
        %v2291 = vsub.s32 %v2287, %v2290
        %vm2292 = vcmp.lt.s32.totalorder %v2291, 0
        %v2293 = vsub.s32 0, %v2291
        %v2294 = vsel %vm2292, %v2293, %v2291
        %v2295 = vclz %v2294
        %v2296 = vsub.s32 %v2295, 2
        %vm2297 = vcmp.gt.s32.totalorder 0, %v2296
        %v2298 = vsel %vm2297, 0, %v2296
        %v2299 = vsub.s32 32, %v2298
        %v2300 = vshll.u32 %v2291, %v2298
        %v2301 = vshrl.u32 %v2283, %v2299
        %v2302 = vor.u32 %v2300, %v2301
        %v2303 = vsub.s32 4294967266, %v2298
        %v2304 = vadd.s32 %v2303, 127
        %v2305 = vshll.u32 %v2304, 23
        %v2306 = vor.u32 4788187, %v2305
        %v2307 = vand.u32 2147483647, %v2306
        %v2309 = vcvt.s32.f32 %v2302
        %v2310 = vmul.f32 %v2309, %v2307
        %v2311 = vxor.u32 %v2310, 2147483648
        %v2312 = vsel %vm2229, %v2311, %v2310
        %v2313 = vsub.s32 4, %v2289
        %v2314 = vsel %vm2229, %v2313, %v2289
        %v2315 = vsel %vm2228, %v666, %v2312
        %v2316 = vsel %vm2228, 0, %v2314
        %v2317 = vcosq.f32.pop %v2315
        %v2318 = vsinq.f32.pop %v2315
        %vm2319 = vweird.f32 %v666
        %v2320 = vadd.s32 %v2316, 3
        %v2321 = vand.u32 %v2320, 3
        %vm2322 = vcmp.lt.s32.totalorder %v2321, 2
        %vm2323 = vcmp.eq.s32.totalorder %v2321, 0
        %v2324 = vxor.u32 %v2318, 2147483648
        %v2325 = vsel %vm2323, %v2317, %v2324
        %vm2326 = vcmp.eq.s32.totalorder %v2321, 2
        %v2327 = vxor.u32 %v2317, 2147483648
        %v2328 = vsel %vm2326, %v2327, %v2318
        %v2329 = vsel %vm2322, %v2325, %v2328
        %v2330 = vsel %vm2319, nan, %v2329
        %v2331 = vld [vmem:[%s5] sm:$0xff]
        %v2332 = vld [vmem:[%s5 + $0x8] sm:$0xff]
        %v2333 = vld [vmem:[%s5 + $0x10] sm:$0xff]
        %v2334 = vld [vmem:[%s5 + $0x18] sm:$0xff]
        %v2335 = vld [vmem:[%s6] sm:$0xff]
        %v2336 = vld [vmem:[%s6 + $0x8] sm:$0xff]
        %v2337 = vld [vmem:[%s6 + $0x10] sm:$0xff]
        %v2338 = vld [vmem:[%s6 + $0x18] sm:$0xff]
        %2340 = vset.pattern.permute.xlu0 0
        %2341 = vperm.xlu0 %2340, %v2335
        %v2342 = vpop.permute.xlu0 %2341
        %2345 = vset.pattern.permute.xlu0 0
        %2346 = vperm.xlu0 %2345, %v2336
        %v2347 = vpop.permute.xlu0 %2346
        %2350 = vset.pattern.permute.xlu0 0
        %2351 = vperm.xlu0 %2350, %v2337
        %v2352 = vpop.permute.xlu0 %2351
        %2355 = vset.pattern.permute.xlu0 0
        %2356 = vperm.xlu0 %2355, %v2338
        %v2357 = vpop.permute.xlu0 %2356
        %vm2359 = vcmask 261120
        %v2361 = vsel %vm2359, %v2331, 0
        %v2364 = vsel %vm2359, %v2332, 0
        %v2367 = vsel %vm2359, %v2333, 0
        %v2370 = vsel %vm2359, %v2334, 0
        %2372 = vmatprep.subr.mxu0 %v874
        %2373 = vmatpush1.msra.mxu0 %v770
        %2374 = vmatprep.subr.mxu0 %v1290
        %2375 = vmatpush1.msra.mxu0 %v1186
        %2376 = vmatprep.subr.mxu0 %v1706
        %2377 = vmatpush1.msra.mxu0 %v1602
        %2378 = vmatprep.subr.mxu0 %v2122
        %2379 = vmatpush1.msra.mxu0 %v2018
        %2380 = vmatprep.subr.mxu0 0.0
        %2381 = vmatpush1.msra.mxu0 0.0
        %2382 = vmatprep.subr.mxu0 0.0
        %2383 = vmatpush1.msra.mxu0 0.0
        %2384 = vmatprep.subr.mxu0 0.0
        %2385 = vmatpush1.msra.mxu0 0.0
        %2386 = vmatprep.subr.mxu0 0.0
        %2387 = vmatpush1.msra.mxu0 0.0
        %2388 = vmatprep.subr.mxu0 0.0
        %2389 = vmatpush1.msra.mxu0 0.0
        %2390 = vmatprep.subr.mxu0 0.0
        %2391 = vmatpush1.msra.mxu0 0.0
        %2392 = vmatprep.subr.mxu0 0.0
        %2393 = vmatpush1.msra.mxu0 0.0
        %2394 = vmatprep.subr.mxu0 0.0
        %2395 = vmatpush1.msra.mxu0 0.0
        %2396 = vmatprep.subr.mxu0 0.0
        %2397 = vmatpush1.msra.mxu0 0.0
        %2398 = vmatprep.subr.mxu0 0.0
        %2399 = vmatpush1.msra.mxu0 0.0
        %2400 = vmatprep.subr.mxu0 0.0
        %2401 = vmatpush1.msra.mxu0 0.0
        %2402 = vmatprep.subr.mxu0 0.0
        %2403 = vmatpush1.msra.mxu0 0.0
        %2404 = vmatprep.subr.mxu0 0.0
        %2405 = vmatpush1.msra.mxu0 0.0
        %2406 = vmatprep.subr.mxu0 0.0
        %2407 = vmatpush1.msra.mxu0 0.0
        %2408 = vmatprep.subr.mxu0 0.0
        %2409 = vmatpush1.msra.mxu0 0.0
        %2410 = vmatprep.subr.mxu0 0.0
        %2411 = vmatpush1.msra.mxu0 0.0
        %2412 = vmatprep.subr.mxu0 0.0
        %2413 = vmatpush1.msra.mxu0 0.0
        %2414 = vmatprep.subr.mxu0 0.0
        %2415 = vmatpush1.msra.mxu0 0.0
        %2416 = vmatprep.subr.mxu0 0.0
        %2417 = vmatpush1.msra.mxu0 0.0
        %2418 = vmatprep.subr.mxu0 0.0
        %2419 = vmatpush1.msra.mxu0 0.0
        %2420 = vmatprep.subr.mxu0 0.0
        %2421 = vmatpush1.msra.mxu0 0.0
        %2422 = vmatprep.subr.mxu0 0.0
        %2423 = vmatpush1.msra.mxu0 0.0
        %2424 = vmatprep.subr.mxu0 0.0
        %2425 = vmatpush1.msra.mxu0 0.0
        %2426 = vmatprep.subr.mxu0 0.0
        %2427 = vmatpush1.msra.mxu0 0.0
        %2428 = vmatprep.subr.mxu0 0.0
        %2429 = vmatpush1.msra.mxu0 0.0
        %2430 = vmatprep.subr.mxu0 0.0
        %2431 = vmatpush1.msra.mxu0 0.0
        %2432 = vmatprep.subr.mxu0 0.0
        %2433 = vmatpush1.msra.mxu0 0.0
        %2434 = vmatprep.subr.mxu0 0.0
        %2435 = vmatpush1.msra.mxu0 0.0
        %2436 = vmatprep.mubr.f32.mxu0 0.0
        %2437 = vmatmul.mubr.f32.gmra.mrb[0].mxu0 %v2361
        %v2438 = vpop.f32.mrb[0].mxu0
        %v2439 = vadd.f32 %v2342, %v2438
        %v2440 = vpop.f32.mrb[0].mxu0
        %v2441 = vadd.f32 %v2342, %v2440
        %2442 = vmatprep.mubr.f32.mxu0 0.0
        %2443 = vmatmul.mubr.f32.gmra.mrb[0].mxu0 %v2364
        %v2444 = vpop.f32.mrb[0].mxu0
        %v2445 = vadd.f32 %v2347, %v2444
        %v2446 = vpop.f32.mrb[0].mxu0
        %v2447 = vadd.f32 %v2347, %v2446
        %2448 = vmatprep.mubr.f32.mxu0 0.0
        %2449 = vmatmul.mubr.f32.gmra.mrb[0].mxu0 %v2367
        %v2450 = vpop.f32.mrb[0].mxu0
        %v2451 = vadd.f32 %v2352, %v2450
        %v2452 = vpop.f32.mrb[0].mxu0
        %v2453 = vadd.f32 %v2352, %v2452
        %2454 = vmatprep.mubr.f32.mxu0 0.0
        %2455 = vmatmul.mubr.f32.gmra.mrb[0].mxu0 %v2370
        %v2456 = vpop.f32.mrb[0].mxu0
        %v2457 = vadd.f32 %v2357, %v2456
        %v2458 = vpop.f32.mrb[0].mxu0
        %v2459 = vadd.f32 %v2357, %v2458
        %2460 = vdwg.mxu0
        %2461 = vmatprep.subr.mxu0 %v1082
        %2462 = vmatpush1.msra.mxu0 %v978
        %2463 = vmatprep.subr.mxu0 %v1498
        %2464 = vmatpush1.msra.mxu0 %v1394
        %2465 = vmatprep.subr.mxu0 %v1914
        %2466 = vmatpush1.msra.mxu0 %v1810
        %2467 = vmatprep.subr.mxu0 %v2330
        %2468 = vmatpush1.msra.mxu0 %v2226
        %2469 = vmatprep.subr.mxu0 0.0
        %2470 = vmatpush1.msra.mxu0 0.0
        %2471 = vmatprep.subr.mxu0 0.0
        %2472 = vmatpush1.msra.mxu0 0.0
        %2473 = vmatprep.subr.mxu0 0.0
        %2474 = vmatpush1.msra.mxu0 0.0
        %2475 = vmatprep.subr.mxu0 0.0
        %2476 = vmatpush1.msra.mxu0 0.0
        %2477 = vmatprep.subr.mxu0 0.0
        %2478 = vmatpush1.msra.mxu0 0.0
        %2479 = vmatprep.subr.mxu0 0.0
        %2480 = vmatpush1.msra.mxu0 0.0
        %2481 = vmatprep.subr.mxu0 0.0
        %2482 = vmatpush1.msra.mxu0 0.0
        %2483 = vmatprep.subr.mxu0 0.0
        %2484 = vmatpush1.msra.mxu0 0.0
        %2485 = vmatprep.subr.mxu0 0.0
        %2486 = vmatpush1.msra.mxu0 0.0
        %2487 = vmatprep.subr.mxu0 0.0
        %2488 = vmatpush1.msra.mxu0 0.0
        %2489 = vmatprep.subr.mxu0 0.0
        %2490 = vmatpush1.msra.mxu0 0.0
        %2491 = vmatprep.subr.mxu0 0.0
        %2492 = vmatpush1.msra.mxu0 0.0
        %2493 = vmatprep.subr.mxu0 0.0
        %2494 = vmatpush1.msra.mxu0 0.0
        %2495 = vmatprep.subr.mxu0 0.0
        %2496 = vmatpush1.msra.mxu0 0.0
        %2497 = vmatprep.subr.mxu0 0.0
        %2498 = vmatpush1.msra.mxu0 0.0
        %2499 = vmatprep.subr.mxu0 0.0
        %2500 = vmatpush1.msra.mxu0 0.0
        %2501 = vmatprep.subr.mxu0 0.0
        %2502 = vmatpush1.msra.mxu0 0.0
        %2503 = vmatprep.subr.mxu0 0.0
        %2504 = vmatpush1.msra.mxu0 0.0
        %2505 = vmatprep.subr.mxu0 0.0
        %2506 = vmatpush1.msra.mxu0 0.0
        %2507 = vmatprep.subr.mxu0 0.0
        %2508 = vmatpush1.msra.mxu0 0.0
        %2509 = vmatprep.subr.mxu0 0.0
        %2510 = vmatpush1.msra.mxu0 0.0
        %2511 = vmatprep.subr.mxu0 0.0
        %2512 = vmatpush1.msra.mxu0 0.0
        %2513 = vmatprep.subr.mxu0 0.0
        %2514 = vmatpush1.msra.mxu0 0.0
        %2515 = vmatprep.subr.mxu0 0.0
        %2516 = vmatpush1.msra.mxu0 0.0
        %2517 = vmatprep.subr.mxu0 0.0
        %2518 = vmatpush1.msra.mxu0 0.0
        %2519 = vmatprep.subr.mxu0 0.0
        %2520 = vmatpush1.msra.mxu0 0.0
        %2521 = vmatprep.subr.mxu0 0.0
        %2522 = vmatpush1.msra.mxu0 0.0
        %2523 = vmatprep.subr.mxu0 0.0
        %2524 = vmatpush1.msra.mxu0 0.0
        %2525 = vmatprep.mubr.f32.mxu0 0.0
        %2526 = vmatmul.mubr.f32.gmra.mrb[0].mxu0 %v2361
        %v2527 = vpop.f32.mrb[0].mxu0
        %v2528 = vadd.f32 %v2342, %v2527
        %v2529 = vpop.f32.mrb[0].mxu0
        %v2530 = vadd.f32 %v2342, %v2529
        %2531 = vmatprep.mubr.f32.mxu0 0.0
        %2532 = vmatmul.mubr.f32.gmra.mrb[0].mxu0 %v2364
        %v2533 = vpop.f32.mrb[0].mxu0
        %v2534 = vadd.f32 %v2347, %v2533
        %v2535 = vpop.f32.mrb[0].mxu0
        %v2536 = vadd.f32 %v2347, %v2535
        %2537 = vmatprep.mubr.f32.mxu0 0.0
        %2538 = vmatmul.mubr.f32.gmra.mrb[0].mxu0 %v2367
        %v2539 = vpop.f32.mrb[0].mxu0
        %v2540 = vadd.f32 %v2352, %v2539
        %v2541 = vpop.f32.mrb[0].mxu0
        %v2542 = vadd.f32 %v2352, %v2541
        %2543 = vmatprep.mubr.f32.mxu0 0.0
        %2544 = vmatmul.mubr.f32.gmra.mrb[0].mxu0 %v2370
        %v2545 = vpop.f32.mrb[0].mxu0
        %v2546 = vadd.f32 %v2357, %v2545
        %v2547 = vpop.f32.mrb[0].mxu0
        %v2548 = vadd.f32 %v2357, %v2547
        %2549 = vdwg.mxu0
        %v2550 = vtanh.pop %v2439
        %v2551 = vtanh.pop %v2441
        %v2552 = vtanh.pop %v2528
        %v2553 = vtanh.pop %v2530
        %v2554 = vtanh.pop %v2445
        %v2555 = vtanh.pop %v2447
        %v2556 = vtanh.pop %v2534
        %v2557 = vtanh.pop %v2536
        %v2558 = vtanh.pop %v2451
        %v2559 = vtanh.pop %v2453
        %v2560 = vtanh.pop %v2540
        %v2561 = vtanh.pop %v2542
        %v2562 = vtanh.pop %v2457
        %v2563 = vtanh.pop %v2459
        %v2564 = vtanh.pop %v2546
        %v2565 = vtanh.pop %v2548
        %v2566 = vld [vmem:[%s7] sm:$0xff]
        %v2567 = vld [vmem:[%s7 + $0x8] sm:$0xff]
        %v2568 = vld [vmem:[%s7 + $0x10] sm:$0xff]
        %v2569 = vld [vmem:[%s7 + $0x18] sm:$0xff]
        %v2570 = vld [vmem:[%s8] sm:$0xff]
        %v2571 = vld [vmem:[%s8 + $0x8] sm:$0xff]
        %v2572 = vld [vmem:[%s8 + $0x10] sm:$0xff]
        %v2573 = vld [vmem:[%s8 + $0x18] sm:$0xff]
        %2575 = vset.pattern.permute.xlu0 0
        %2576 = vperm.xlu0 %2575, %v2570
        %v2577 = vpop.permute.xlu0 %2576
        %2580 = vset.pattern.permute.xlu0 0
        %2581 = vperm.xlu0 %2580, %v2571
        %v2582 = vpop.permute.xlu0 %2581
        %2585 = vset.pattern.permute.xlu0 0
        %2586 = vperm.xlu0 %2585, %v2572
        %v2587 = vpop.permute.xlu0 %2586
        %2590 = vset.pattern.permute.xlu0 0
        %2591 = vperm.xlu0 %2590, %v2573
        %v2592 = vpop.permute.xlu0 %2591
        %v2595 = vsel %vm2359, %v2566, 0
        %v2598 = vsel %vm2359, %v2567, 0
        %v2601 = vsel %vm2359, %v2568, 0
        %v2604 = vsel %vm2359, %v2569, 0
        %2606 = vmatprep.subr.mxu0 %v2551
        %2607 = vmatpush1.msra.mxu0 %v2550
        %2608 = vmatprep.subr.mxu0 %v2555
        %2609 = vmatpush1.msra.mxu0 %v2554
        %2610 = vmatprep.subr.mxu0 %v2559
        %2611 = vmatpush1.msra.mxu0 %v2558
        %2612 = vmatprep.subr.mxu0 %v2563
        %2613 = vmatpush1.msra.mxu0 %v2562
        %2614 = vmatprep.subr.mxu0 0.0
        %2615 = vmatpush1.msra.mxu0 0.0
        %2616 = vmatprep.subr.mxu0 0.0
        %2617 = vmatpush1.msra.mxu0 0.0
        %2618 = vmatprep.subr.mxu0 0.0
        %2619 = vmatpush1.msra.mxu0 0.0
        %2620 = vmatprep.subr.mxu0 0.0
        %2621 = vmatpush1.msra.mxu0 0.0
        %2622 = vmatprep.subr.mxu0 0.0
        %2623 = vmatpush1.msra.mxu0 0.0
        %2624 = vmatprep.subr.mxu0 0.0
        %2625 = vmatpush1.msra.mxu0 0.0
        %2626 = vmatprep.subr.mxu0 0.0
        %2627 = vmatpush1.msra.mxu0 0.0
        %2628 = vmatprep.subr.mxu0 0.0
        %2629 = vmatpush1.msra.mxu0 0.0
        %2630 = vmatprep.subr.mxu0 0.0
        %2631 = vmatpush1.msra.mxu0 0.0
        %2632 = vmatprep.subr.mxu0 0.0
        %2633 = vmatpush1.msra.mxu0 0.0
        %2634 = vmatprep.subr.mxu0 0.0
        %2635 = vmatpush1.msra.mxu0 0.0
        %2636 = vmatprep.subr.mxu0 0.0
        %2637 = vmatpush1.msra.mxu0 0.0
        %2638 = vmatprep.subr.mxu0 0.0
        %2639 = vmatpush1.msra.mxu0 0.0
        %2640 = vmatprep.subr.mxu0 0.0
        %2641 = vmatpush1.msra.mxu0 0.0
        %2642 = vmatprep.subr.mxu0 0.0
        %2643 = vmatpush1.msra.mxu0 0.0
        %2644 = vmatprep.subr.mxu0 0.0
        %2645 = vmatpush1.msra.mxu0 0.0
        %2646 = vmatprep.subr.mxu0 0.0
        %2647 = vmatpush1.msra.mxu0 0.0
        %2648 = vmatprep.subr.mxu0 0.0
        %2649 = vmatpush1.msra.mxu0 0.0
        %2650 = vmatprep.subr.mxu0 0.0
        %2651 = vmatpush1.msra.mxu0 0.0
        %2652 = vmatprep.subr.mxu0 0.0
        %2653 = vmatpush1.msra.mxu0 0.0
        %2654 = vmatprep.subr.mxu0 0.0
        %2655 = vmatpush1.msra.mxu0 0.0
        %2656 = vmatprep.subr.mxu0 0.0
        %2657 = vmatpush1.msra.mxu0 0.0
        %2658 = vmatprep.subr.mxu0 0.0
        %2659 = vmatpush1.msra.mxu0 0.0
        %2660 = vmatprep.subr.mxu0 0.0
        %2661 = vmatpush1.msra.mxu0 0.0
        %2662 = vmatprep.subr.mxu0 0.0
        %2663 = vmatpush1.msra.mxu0 0.0
        %2664 = vmatprep.subr.mxu0 0.0
        %2665 = vmatpush1.msra.mxu0 0.0
        %2666 = vmatprep.subr.mxu0 0.0
        %2667 = vmatpush1.msra.mxu0 0.0
        %2668 = vmatprep.subr.mxu0 0.0
        %2669 = vmatpush1.msra.mxu0 0.0
        %2670 = vmatprep.mubr.f32.mxu0 0.0
        %2671 = vmatmul.mubr.f32.gmra.mrb[0].mxu0 %v2595
        %v2672 = vpop.f32.mrb[0].mxu0
        %v2673 = vadd.f32 %v2577, %v2672
        %v2674 = vpop.f32.mrb[0].mxu0
        %v2675 = vadd.f32 %v2577, %v2674
        %2676 = vmatprep.mubr.f32.mxu0 0.0
        %2677 = vmatmul.mubr.f32.gmra.mrb[0].mxu0 %v2598
        %v2678 = vpop.f32.mrb[0].mxu0
        %v2679 = vadd.f32 %v2582, %v2678
        %v2680 = vpop.f32.mrb[0].mxu0
        %v2681 = vadd.f32 %v2582, %v2680
        %2682 = vmatprep.mubr.f32.mxu0 0.0
        %2683 = vmatmul.mubr.f32.gmra.mrb[0].mxu0 %v2601
        %v2684 = vpop.f32.mrb[0].mxu0
        %v2685 = vadd.f32 %v2587, %v2684
        %v2686 = vpop.f32.mrb[0].mxu0
        %v2687 = vadd.f32 %v2587, %v2686
        %2688 = vmatprep.mubr.f32.mxu0 0.0
        %2689 = vmatmul.mubr.f32.gmra.mrb[0].mxu0 %v2604
        %v2690 = vpop.f32.mrb[0].mxu0
        %v2691 = vadd.f32 %v2592, %v2690
        %v2692 = vpop.f32.mrb[0].mxu0
        %v2693 = vadd.f32 %v2592, %v2692
        %2694 = vdwg.mxu0
        %2695 = vmatprep.subr.mxu0 %v2553
        %2696 = vmatpush1.msra.mxu0 %v2552
        %2697 = vmatprep.subr.mxu0 %v2557
        %2698 = vmatpush1.msra.mxu0 %v2556
        %2699 = vmatprep.subr.mxu0 %v2561
        %2700 = vmatpush1.msra.mxu0 %v2560
        %2701 = vmatprep.subr.mxu0 %v2565
        %2702 = vmatpush1.msra.mxu0 %v2564
        %2703 = vmatprep.subr.mxu0 0.0
        %2704 = vmatpush1.msra.mxu0 0.0
        %2705 = vmatprep.subr.mxu0 0.0
        %2706 = vmatpush1.msra.mxu0 0.0
        %2707 = vmatprep.subr.mxu0 0.0
        %2708 = vmatpush1.msra.mxu0 0.0
        %2709 = vmatprep.subr.mxu0 0.0
        %2710 = vmatpush1.msra.mxu0 0.0
        %2711 = vmatprep.subr.mxu0 0.0
        %2712 = vmatpush1.msra.mxu0 0.0
        %2713 = vmatprep.subr.mxu0 0.0
        %2714 = vmatpush1.msra.mxu0 0.0
        %2715 = vmatprep.subr.mxu0 0.0
        %2716 = vmatpush1.msra.mxu0 0.0
        %2717 = vmatprep.subr.mxu0 0.0
        %2718 = vmatpush1.msra.mxu0 0.0
        %2719 = vmatprep.subr.mxu0 0.0
        %2720 = vmatpush1.msra.mxu0 0.0
        %2721 = vmatprep.subr.mxu0 0.0
        %2722 = vmatpush1.msra.mxu0 0.0
        %2723 = vmatprep.subr.mxu0 0.0
        %2724 = vmatpush1.msra.mxu0 0.0
        %2725 = vmatprep.subr.mxu0 0.0
        %2726 = vmatpush1.msra.mxu0 0.0
        %2727 = vmatprep.subr.mxu0 0.0
        %2728 = vmatpush1.msra.mxu0 0.0
        %2729 = vmatprep.subr.mxu0 0.0
        %2730 = vmatpush1.msra.mxu0 0.0
        %2731 = vmatprep.subr.mxu0 0.0
        %2732 = vmatpush1.msra.mxu0 0.0
        %2733 = vmatprep.subr.mxu0 0.0
        %2734 = vmatpush1.msra.mxu0 0.0
        %2735 = vmatprep.subr.mxu0 0.0
        %2736 = vmatpush1.msra.mxu0 0.0
        %2737 = vmatprep.subr.mxu0 0.0
        %2738 = vmatpush1.msra.mxu0 0.0
        %2739 = vmatprep.subr.mxu0 0.0
        %2740 = vmatpush1.msra.mxu0 0.0
        %2741 = vmatprep.subr.mxu0 0.0
        %2742 = vmatpush1.msra.mxu0 0.0
        %2743 = vmatprep.subr.mxu0 0.0
        %2744 = vmatpush1.msra.mxu0 0.0
        %2745 = vmatprep.subr.mxu0 0.0
        %2746 = vmatpush1.msra.mxu0 0.0
        %2747 = vmatprep.subr.mxu0 0.0
        %2748 = vmatpush1.msra.mxu0 0.0
        %2749 = vmatprep.subr.mxu0 0.0
        %2750 = vmatpush1.msra.mxu0 0.0
        %2751 = vmatprep.subr.mxu0 0.0
        %2752 = vmatpush1.msra.mxu0 0.0
        %2753 = vmatprep.subr.mxu0 0.0
        %2754 = vmatpush1.msra.mxu0 0.0
        %2755 = vmatprep.subr.mxu0 0.0
        %2756 = vmatpush1.msra.mxu0 0.0
        %2757 = vmatprep.subr.mxu0 0.0
        %2758 = vmatpush1.msra.mxu0 0.0
        %2759 = vmatprep.mubr.f32.mxu0 0.0
        %2760 = vmatmul.mubr.f32.gmra.mrb[0].mxu0 %v2595
        %v2761 = vpop.f32.mrb[0].mxu0
        %v2762 = vadd.f32 %v2577, %v2761
        %v2763 = vpop.f32.mrb[0].mxu0
        %v2764 = vadd.f32 %v2577, %v2763
        %2765 = vmatprep.mubr.f32.mxu0 0.0
        %2766 = vmatmul.mubr.f32.gmra.mrb[0].mxu0 %v2598
        %v2767 = vpop.f32.mrb[0].mxu0
        %v2768 = vadd.f32 %v2582, %v2767
        %v2769 = vpop.f32.mrb[0].mxu0
        %v2770 = vadd.f32 %v2582, %v2769
        %2771 = vmatprep.mubr.f32.mxu0 0.0
        %2772 = vmatmul.mubr.f32.gmra.mrb[0].mxu0 %v2601
        %v2773 = vpop.f32.mrb[0].mxu0
        %v2774 = vadd.f32 %v2587, %v2773
        %v2775 = vpop.f32.mrb[0].mxu0
        %v2776 = vadd.f32 %v2587, %v2775
        %2777 = vmatprep.mubr.f32.mxu0 0.0
        %2778 = vmatmul.mubr.f32.gmra.mrb[0].mxu0 %v2604
        %v2779 = vpop.f32.mrb[0].mxu0
        %v2780 = vadd.f32 %v2592, %v2779
        %v2781 = vpop.f32.mrb[0].mxu0
        %v2782 = vadd.f32 %v2592, %v2781
        %2783 = vdwg.mxu0
        %v2784 = vtanh.pop %v2673
        %v2785 = vtanh.pop %v2675
        %v2786 = vtanh.pop %v2762
        %v2787 = vtanh.pop %v2764
        %v2788 = vtanh.pop %v2679
        %v2789 = vtanh.pop %v2681
        %v2790 = vtanh.pop %v2768
        %v2791 = vtanh.pop %v2770
        %v2792 = vtanh.pop %v2685
        %v2793 = vtanh.pop %v2687
        %v2794 = vtanh.pop %v2774
        %v2795 = vtanh.pop %v2776
        %v2796 = vtanh.pop %v2691
        %v2797 = vtanh.pop %v2693
        %v2798 = vtanh.pop %v2780
        %v2799 = vtanh.pop %v2782
        %v2800 = vld [vmem:[%s9] sm:$0x1]
        %v2801 = vld [vmem:[#allocation2] sm:$0x1]
        %2803 = vset.pattern.permute.xlu0 0
        %2804 = vperm.xlu0 %2803, %v2801
        %v2805 = vpop.permute.xlu0 %2804
        %v2807 = vlaneseq
        %v2808 = vshrl.u32 %v2807, 7
        %v2809 = vsub.s32 0, %v2808
        %v2810 = vrot.slane %v2805, %v2809
        %v2812 = vsel %vm2359, %v2800, 0
        %2814 = vmatprep.subr.mxu0 %v2785
        %2815 = vmatpush1.msra.mxu0 %v2784
        %2816 = vmatprep.subr.mxu0 %v2789
        %2817 = vmatpush1.msra.mxu0 %v2788
        %2818 = vmatprep.subr.mxu0 %v2793
        %2819 = vmatpush1.msra.mxu0 %v2792
        %2820 = vmatprep.subr.mxu0 %v2797
        %2821 = vmatpush1.msra.mxu0 %v2796
        %2822 = vmatprep.subr.mxu0 0.0
        %2823 = vmatpush1.msra.mxu0 0.0
        %2824 = vmatprep.subr.mxu0 0.0
        %2825 = vmatpush1.msra.mxu0 0.0
        %2826 = vmatprep.subr.mxu0 0.0
        %2827 = vmatpush1.msra.mxu0 0.0
        %2828 = vmatprep.subr.mxu0 0.0
        %2829 = vmatpush1.msra.mxu0 0.0
        %2830 = vmatprep.subr.mxu0 0.0
        %2831 = vmatpush1.msra.mxu0 0.0
        %2832 = vmatprep.subr.mxu0 0.0
        %2833 = vmatpush1.msra.mxu0 0.0
        %2834 = vmatprep.subr.mxu0 0.0
        %2835 = vmatpush1.msra.mxu0 0.0
        %2836 = vmatprep.subr.mxu0 0.0
        %2837 = vmatpush1.msra.mxu0 0.0
        %2838 = vmatprep.subr.mxu0 0.0
        %2839 = vmatpush1.msra.mxu0 0.0
        %2840 = vmatprep.subr.mxu0 0.0
        %2841 = vmatpush1.msra.mxu0 0.0
        %2842 = vmatprep.subr.mxu0 0.0
        %2843 = vmatpush1.msra.mxu0 0.0
        %2844 = vmatprep.subr.mxu0 0.0
        %2845 = vmatpush1.msra.mxu0 0.0
        %2846 = vmatprep.subr.mxu0 0.0
        %2847 = vmatpush1.msra.mxu0 0.0
        %2848 = vmatprep.subr.mxu0 0.0
        %2849 = vmatpush1.msra.mxu0 0.0
        %2850 = vmatprep.subr.mxu0 0.0
        %2851 = vmatpush1.msra.mxu0 0.0
        %2852 = vmatprep.subr.mxu0 0.0
        %2853 = vmatpush1.msra.mxu0 0.0
        %2854 = vmatprep.subr.mxu0 0.0
        %2855 = vmatpush1.msra.mxu0 0.0
        %2856 = vmatprep.subr.mxu0 0.0
        %2857 = vmatpush1.msra.mxu0 0.0
        %2858 = vmatprep.subr.mxu0 0.0
        %2859 = vmatpush1.msra.mxu0 0.0
        %2860 = vmatprep.subr.mxu0 0.0
        %2861 = vmatpush1.msra.mxu0 0.0
        %2862 = vmatprep.subr.mxu0 0.0
        %2863 = vmatpush1.msra.mxu0 0.0
        %2864 = vmatprep.subr.mxu0 0.0
        %2865 = vmatpush1.msra.mxu0 0.0
        %2866 = vmatprep.subr.mxu0 0.0
        %2867 = vmatpush1.msra.mxu0 0.0
        %2868 = vmatprep.subr.mxu0 0.0
        %2869 = vmatpush1.msra.mxu0 0.0
        %2870 = vmatprep.subr.mxu0 0.0
        %2871 = vmatpush1.msra.mxu0 0.0
        %2872 = vmatprep.subr.mxu0 0.0
        %2873 = vmatpush1.msra.mxu0 0.0
        %2874 = vmatprep.subr.mxu0 0.0
        %2875 = vmatpush1.msra.mxu0 0.0
        %2876 = vmatprep.subr.mxu0 0.0
        %2877 = vmatpush1.msra.mxu0 0.0
        %2878 = vmatprep.mubr.f32.mxu0 0.0
        %2879 = vmatmul.mubr.f32.gmra.mrb[0].mxu0 %v2812
        %v2880 = vpop.f32.mrb[0].mxu0
        %v2881 = vadd.f32 %v2810, %v2880
        %v2882 = vpop.f32.mrb[0].mxu0
        %v2883 = vadd.f32 %v2810, %v2882
        %2884 = vdwg.mxu0
        %2885 = vmatprep.subr.mxu0 %v2787
        %2886 = vmatpush1.msra.mxu0 %v2786
        %2887 = vmatprep.subr.mxu0 %v2791
        %2888 = vmatpush1.msra.mxu0 %v2790
        %2889 = vmatprep.subr.mxu0 %v2795
        %2890 = vmatpush1.msra.mxu0 %v2794
        %2891 = vmatprep.subr.mxu0 %v2799
        %2892 = vmatpush1.msra.mxu0 %v2798
        %2893 = vmatprep.subr.mxu0 0.0
        %2894 = vmatpush1.msra.mxu0 0.0
        %2895 = vmatprep.subr.mxu0 0.0
        %2896 = vmatpush1.msra.mxu0 0.0
        %2897 = vmatprep.subr.mxu0 0.0
        %2898 = vmatpush1.msra.mxu0 0.0
        %2899 = vmatprep.subr.mxu0 0.0
        %2900 = vmatpush1.msra.mxu0 0.0
        %2901 = vmatprep.subr.mxu0 0.0
        %2902 = vmatpush1.msra.mxu0 0.0
        %2903 = vmatprep.subr.mxu0 0.0
        %2904 = vmatpush1.msra.mxu0 0.0
        %2905 = vmatprep.subr.mxu0 0.0
        %2906 = vmatpush1.msra.mxu0 0.0
        %2907 = vmatprep.subr.mxu0 0.0
        %2908 = vmatpush1.msra.mxu0 0.0
        %2909 = vmatprep.subr.mxu0 0.0
        %2910 = vmatpush1.msra.mxu0 0.0
        %2911 = vmatprep.subr.mxu0 0.0
        %2912 = vmatpush1.msra.mxu0 0.0
        %2913 = vmatprep.subr.mxu0 0.0
        %2914 = vmatpush1.msra.mxu0 0.0
        %2915 = vmatprep.subr.mxu0 0.0
        %2916 = vmatpush1.msra.mxu0 0.0
        %2917 = vmatprep.subr.mxu0 0.0
        %2918 = vmatpush1.msra.mxu0 0.0
        %2919 = vmatprep.subr.mxu0 0.0
        %2920 = vmatpush1.msra.mxu0 0.0
        %2921 = vmatprep.subr.mxu0 0.0
        %2922 = vmatpush1.msra.mxu0 0.0
        %2923 = vmatprep.subr.mxu0 0.0
        %2924 = vmatpush1.msra.mxu0 0.0
        %2925 = vmatprep.subr.mxu0 0.0
        %2926 = vmatpush1.msra.mxu0 0.0
        %2927 = vmatprep.subr.mxu0 0.0
        %2928 = vmatpush1.msra.mxu0 0.0
        %2929 = vmatprep.subr.mxu0 0.0
        %2930 = vmatpush1.msra.mxu0 0.0
        %2931 = vmatprep.subr.mxu0 0.0
        %2932 = vmatpush1.msra.mxu0 0.0
        %2933 = vmatprep.subr.mxu0 0.0
        %2934 = vmatpush1.msra.mxu0 0.0
        %2935 = vmatprep.subr.mxu0 0.0
        %2936 = vmatpush1.msra.mxu0 0.0
        %2937 = vmatprep.subr.mxu0 0.0
        %2938 = vmatpush1.msra.mxu0 0.0
        %2939 = vmatprep.subr.mxu0 0.0
        %2940 = vmatpush1.msra.mxu0 0.0
        %2941 = vmatprep.subr.mxu0 0.0
        %2942 = vmatpush1.msra.mxu0 0.0
        %2943 = vmatprep.subr.mxu0 0.0
        %2944 = vmatpush1.msra.mxu0 0.0
        %2945 = vmatprep.subr.mxu0 0.0
        %2946 = vmatpush1.msra.mxu0 0.0
        %2947 = vmatprep.subr.mxu0 0.0
        %2948 = vmatpush1.msra.mxu0 0.0
        %2949 = vmatprep.mubr.f32.mxu0 0.0
        %2950 = vmatmul.mubr.f32.gmra.mrb[0].mxu0 %v2812
        %v2951 = vpop.f32.mrb[0].mxu0
        %v2952 = vadd.f32 %v2810, %v2951
        %v2953 = vpop.f32.mrb[0].mxu0
        %v2954 = vadd.f32 %v2810, %v2953
        %2955 = vdwg.mxu0
        %v2960 = vcombine.low %v2881, %v2883
        %v2961 = vcombine.low %v2952, %v2954
        %v2963 = vunpack.c.l.s4 1966171168
        %v2964 = vunpack.c.0.s8 %v2963
        %v2965 = vlaneseq
        %v2966 = vshrl.u32 %v2965, 7
        %v2967 = vsub.s32 %v2964, %v2966
        %v2968 = vrot.slane %v2960, %v2967
        %v2970 = vunpack.c.l.s4 1966171168
        %v2971 = vunpack.c.0.s8 %v2970
        %v2972 = vlaneseq
        %v2973 = vshrl.u32 %v2972, 7
        %v2974 = vsub.s32 %v2971, %v2973
        %v2975 = vrot.slane %v2961, %v2974
        %v2976 = vcombine.low %v2968, %v2975
        %v2978 = vunpack.c.l.s4 1966171168
        %v2979 = vunpack.c.0.s8 %v2978
        %v2980 = vlaneseq
        %v2981 = vshrl.u32 %v2980, 7
        %v2982 = vsub.s32 %v2979, %v2981
        %v2983 = vrot.slane %v2976, %v2982
        %v2985 = vlaneseq
        %vm2986 = vcmp.ge.s32.totalorder %v2985, 0
        %vm2987 = vcmp.lt.s32.totalorder %v2985, 512
        %vm2988 = vmand %vm2986, %vm2987
        %2989 = vst.msk [vmem:[%s408] sm:$0xf] %vm2988, %v2983
        %s2990 = sand.u32 %s281, 1
        %s2991 = scalar_lea.sflag [#allocation4], %s2990
        %s2992 = sand.u32 %s281, 1
        %s2993 = smul.addr %s2992, 4
        %s2994 = scalar_lea.vmem [#allocation3], %s2993
        // Predicated region
        $region65: #{tpu_custom_call.1} parent=63 // pred_check
          %p2995 = pneg %p291
        $region66: #{tpu_custom_call.1} parent=63 // pred_check_branch
          %2997 = sbr.rel (%p2995) target = $region68
        $region67: #{tpu_custom_call.1} parent=63 // pred_region
          %s2998 = smul.u32 4, %s27
          %s3000 = ssub.s32 64, 64
          %3001 = vsyncadd %s2991, %s3000
          %s3002 = smul.addr %s2998, 16
          %s3003 = scalar_lea.hbm %s11, %s3002
          %s3005 = sshll.u32 %s2994, 4
          %s3006 = int_to_ptr.vmem [resolvable:$true] %s3005
          %3008 = dma.vmem_to_hbm [thread:$0]  %s3006, 64, %s3003, %s2991
        $region68: #{tpu_custom_call.1} parent=63 // pred_fallthru
          _
      $region64: #{tpu_custom_call.1} parent=5 // pred_fallthru
        _
      %p3009 = scmp.le.s32.totalorder 2, %s22
      // Predicated region
      $region69: #{tpu_custom_call.1} parent=5 // pred_check
        %p3010 = pneg %p3009
      $region70: #{tpu_custom_call.1} parent=5 // pred_check_branch
        %3012 = sbr.rel (%p3010) target = $region72
      $region71: #{tpu_custom_call.1} parent=5 // pred_region
        %s3013 = ssub.s32 %s22, 2
        // Predicated region
        $region73: #{tpu_custom_call.1} parent=71 // pred_check
          %p3014 = pneg %p297
        $region74: #{tpu_custom_call.1} parent=71 // pred_check_branch
          %3016 = sbr.rel (%p3014) target = $region76
        $region75: #{tpu_custom_call.1} parent=71 // pred_region
          %s3017 = sand.u32 %s282, 1
          %s3018 = scalar_lea.sflag [#allocation4], %s3017
          %s3019 = sand.u32 %s282, 1
          %s3020 = smul.addr %s3019, 4
          %s3021 = scalar_lea.vmem [#allocation3], %s3020
          %3022 = dma.done %s3018, 64
        $region76: #{tpu_custom_call.1} parent=71 // pred_fallthru
          _
      $region72: #{tpu_custom_call.1} parent=5 // pred_fallthru
        _
    $region6: #{tpu_custom_call.1} parent=1 // loop_footer
      %s26 = sadd.s32 1, %s22
    $region7: #{tpu_custom_call.1} parent=1 // loop_footer_branch
      %21 = sbr.rel target = $region3
    $region8: #{tpu_custom_call.1} parent=1 // loop_exit
      _
    %3023 = vsyncpa [#allocation4], 1
    %s3024 = scalar_lea.sflag [#allocation4], 1
    %3025 = vsyncpa %s3024, 1

</llo_original>
